<compile_context>
chip_gen: v5e
topology: v5e:2x2
jax: 0.10.0
libtpu: 0.0.40
codegen_flags: <defaults>
</compile_context>

<pallas_src>
import numpy as np
import jax
import jax.numpy as jnp
from jax.experimental import pallas as pl
from jax.experimental.pallas import tpu as pltpu

NUM_LABELS = 12     # CutLinear.load_from_checkpoint(..., num_labels=12)
ATT_SCALE = 0.5     # attenuation * depth-step * frequency factor
REFL_GAIN = 1.0
SCAT_GAIN = 0.3


# ---------------------------------------------------------------------------
# init-time glue (plain numpy): faithful port of the PyTorch helpers
# compute_grid / compute_grid_inverse / normalize_grid / dilate / erode /
# morphology_close used to build the fan geometry and mask_fan.
# ---------------------------------------------------------------------------
def _conv3x3_ones(x):
    h, w = x.shape
    p = np.pad(x, 1)
    out = np.zeros_like(x)
    for dy in range(3):
        for dx in range(3):
            out += p[dy:dy + h, dx:dx + w]
    return out


def _dilate(x):                       # x: (1, h, w)
    return (_conv3x3_ones(x[0]) > 0).astype(np.float32)[None]


def _erode(x):                        # x: (1, h, w)
    inv = 1.0 - x[0]
    return (1.0 - (_conv3x3_ones(inv) > 0).astype(np.float32))[None]


def _morphology_close(x):
    return _erode(_dilate(x))


def compute_grid(w, h, center_x, center_y, r1, r2, theta):
    angles = np.linspace(-theta, theta, w)
    radii = np.linspace(r1, r2, h)
    sin_a, cos_a = np.sin(angles), np.cos(angles)
    grid = np.zeros((h, w, 2), np.float32)
    for i, radius in enumerate(radii):
        x = center_x + radius * sin_a
        y = center_y + radius * cos_a
        grid[i] = np.stack((x, y), axis=1)
    return grid


def compute_grid_inverse(grid):
    h, w, _ = grid.shape
    inverse_grid = np.zeros((h, w, 2), np.float32)
    mask = np.zeros((1, h, w), np.float32)
    for j in range(h):
        for i in range(w):
            xi, yi = np.round(grid[j, i]).astype(np.int64)
            if 0 <= xi < w and 0 <= yi < h:
                inverse_grid[yi, xi] = (i, j)
                mask[0, yi, xi] = 1.0
    return inverse_grid, _morphology_close(mask)


def normalize_grid(grid):
    h, w, _ = grid.shape
    return grid / np.array([h, w], np.float32) * 2.0 - 1.0


def init_grids(w, h, center_x, center_y, r1, r2, theta):
    grid = compute_grid(w, h, center_x, center_y, r1, r2, theta)
    inverse_grid, mask = compute_grid_inverse(grid)
    return normalize_grid(grid), normalize_grid(inverse_grid), mask


# ---------------------------------------------------------------------------
# generation-aware batch tiling
# ---------------------------------------------------------------------------
def _num_tensorcores():
    """Best-effort TensorCores-per-chip (v7x/v4 megacore = 2, v5e/v6e = 1)."""
    try:
        kind = jax.devices()[0].device_kind.lower()
        if "v7" in kind or "7x" in kind or "v4" in kind:
            return 2
    except Exception:
        pass
    return 1


def _batch_tile(B):
    """Batch elements per grid step.

    Single-TC chips (v5e/v6e): one full-slab step (per-step pipeline overhead
    ~0.35us dominates at these sizes, so fewer steps is better).  Dual-TC chips
    (v7x): two "parallel" tiles so both TensorCores get work.  Per-step blocks
    are a few hundred KiB -- far under every generation's VMEM budget.
    """
    if _num_tensorcores() >= 2 and B >= 2 and B % 2 == 0:
        return B // 2
    return B


# ---------------------------------------------------------------------------
# Pallas kernel factory: the static property table is baked in as immediates.
# ---------------------------------------------------------------------------
def _make_usr_kernel(z_tab, natt_tab, smu_tab):
    z_tab = tuple(float(v) for v in z_tab)          # acoustic impedance
    natt_tab = tuple(float(v) for v in natt_tab)    # -ATT_SCALE * attenuation
    smu_tab = tuple(float(v) for v in smu_tab)      # SCAT_GAIN * scattering

    def kernel(lab_ref, tri_ref, mask_ref, rowkeep_ref, out_ref):
        """
        lab_ref     : (nb, H, W) int32 label-map block (NCHW, channel squeezed)
        tri_ref     : (H, H)  f32 lower-triangular ones (depth cumsum op, MXU)
        mask_ref    : (H, W)  f32 fan mask         (constant block -> DMA'd once)
        rowkeep_ref : (H, 1)  f32 last-row zero mask (constant block -> DMA'd once)
        out_ref     : (nb, H, W) f32
        """
        nb, H, W = lab_ref.shape
        tri = tri_ref[...]
        msk = mask_ref[...]
        row_keep = rowkeep_ref[...]              # (H, 1), lane-broadcasts

        for b in range(nb):                      # static unroll over batch tile
            lab = lab_ref[b]                     # (H, W) int32

            # label -> acoustic property maps (compares + selects on the VPU);
            # scalar gains already folded into the immediates.
            z_map = jnp.full(lab.shape, z_tab[0], jnp.float32)
            natt_map = jnp.full(lab.shape, natt_tab[0], jnp.float32)
            smu_map = jnp.full(lab.shape, smu_tab[0], jnp.float32)
            for k in range(1, NUM_LABELS):
                sel = lab == k
                z_map = jnp.where(sel, z_tab[k], z_map)
                natt_map = jnp.where(sel, natt_tab[k], natt_map)
                smu_map = jnp.where(sel, smu_tab[k], smu_map)

            # impedance mismatch across consecutive depth rows -> reflection.
            z_next = pltpu.roll(z_map, shift=H - 1, axis=0)   # == roll(z,-1,axis=0)
            r = (z_next - z_map) * pl.reciprocal(z_next + z_map + 1e-6, approx=True)
            refl = (r * r) * row_keep            # no boundary past the last row

            # fused depth-wise cumulative attenuation + transmission:
            #   exp(-ATT*cumsum(att)) * exp(cumsum(logT) - logT)
            #     = exp(cumsum(-ATT*att + logT) - logT)
            # -> ONE triangular f32 matmul (MXU) + ONE exp (EUP).
            log_t = jnp.log(jnp.maximum(1.0 - refl, 1e-6))
            v = natt_map + log_t
            cum = jnp.dot(tri, v, preferred_element_type=jnp.float32)
            gain = jnp.exp(cum - log_t)

            us = gain * (REFL_GAIN * refl + smu_map)

            # TODO(synk): USR's grid_sample polar<->cartesian warps (grid /
            # inverse_grid) and its stochastic speckle texture are not reproduced.
            out_ref[b] = us * msk                # final `X * mask_fan` of forward()

    return kernel


# ---------------------------------------------------------------------------
# Module wrapper
# ---------------------------------------------------------------------------
class MergedLinearLabel11WOG:
    def __init__(self, h=64, w=128):
        self.h, self.w = h, w
        # deterministic synthetic acoustic-property table (checkpoint not loaded)
        lab_ids = np.arange(NUM_LABELS, dtype=np.float32)
        self.z_tab = (1.0 + 0.5 * lab_ids).astype(np.float32)            # impedance
        self.natt_tab = (-ATT_SCALE * (0.02 + 0.03 * lab_ids)).astype(np.float32)
        self.smu_tab = (SCAT_GAIN * (0.05 * lab_ids)).astype(np.float32)
        self._kernel = _make_usr_kernel(self.z_tab, self.natt_tab, self.smu_tab)

        # lower-triangular cumsum operator (exact 0/1, kept f32 for fidelity)
        self.tri = jnp.asarray(np.tril(np.ones((h, h), np.float32)))
        # zero the reflection of the deepest row (no boundary past last sample)
        rk = np.ones((h, 1), np.float32)
        rk[-1, 0] = 0.0
        self.row_keep = jnp.asarray(rk)

        grid, inverse_grid, mask_fan = init_grids(
            w, h, w / 2.0, -h * 0.25, h * 0.3, h * 1.1, np.pi / 5.0)
        self.grid = jnp.asarray(grid)
        self.inverse_grid = jnp.asarray(inverse_grid)
        self.mask_fan = jnp.asarray(mask_fan)          # (1, H, W) f32

    def __call__(self, X, grid=None, inverse_grid=None, mask_fan=None):
        # X: (B, 1, H, W) NCHW integer label map
        if mask_fan is None:
            mask_fan = self.mask_fan
        B = X.shape[0]
        H, W = self.h, self.w
        if X.dtype != jnp.int32:
            X = X.astype(jnp.int32)

        nb = _batch_tile(B)     # 1 step on v5e/v6e; 2 parallel tiles on v7x
        out = pl.pallas_call(
            self._kernel,
            out_shape=jax.ShapeDtypeStruct((B, 1, H, W), jnp.float32),
            grid=(B // nb,),
            in_specs=[
                # labels consumed directly in NCHW (channel dim squeezed);
                # W is the lane axis, blocks cover full H/W so no padding needed.
                pl.BlockSpec((nb, None, H, W), lambda i: (i, 0, 0, 0)),
                # constant operands: same block index every step -> DMA'd once.
                pl.BlockSpec((H, H), lambda i: (0, 0)),             # tri
                pl.BlockSpec((None, H, W), lambda i: (0, 0, 0)),    # fan mask
                pl.BlockSpec((H, 1), lambda i: (0, 0)),             # last-row mask
            ],
            out_specs=pl.BlockSpec((nb, None, H, W), lambda i: (i, 0, 0, 0)),
            compiler_params=pltpu.CompilerParams(
                dimension_semantics=("parallel",)),
        )(X, self.tri, mask_fan, self.row_keep)
        return out                                     # (B, 1, H, W)


# pure-JAX reference of the same math (sanity check for the kernel)
def _usr_reference(lab, z_tab, natt_tab, smu_tab, mask_fan):
    z = jnp.asarray(z_tab)[lab]
    natt = jnp.asarray(natt_tab)[lab]                 # already -ATT_SCALE*att
    smu = jnp.asarray(smu_tab)[lab]                   # already SCAT_GAIN*mu
    z_next = jnp.roll(z, -1, axis=1)
    refl = ((z_next - z) / (z_next + z + 1e-6)) ** 2
    refl = refl.at[:, -1, :].set(0.0)
    log_t = jnp.log(jnp.maximum(1.0 - refl, 1e-6))
    gain = jnp.exp(jnp.cumsum(natt + log_t, axis=1) - log_t)
    us = gain * (REFL_GAIN * refl + smu)
    return us * mask_fan


if __name__ == "__main__":
    B, H, W = 2, 64, 128
    key = jax.random.PRNGKey(0)
    X = jax.random.randint(key, (B, 1, H, W), 0, NUM_LABELS, dtype=jnp.int32)

    model = MergedLinearLabel11WOG(h=H, w=W)
    out = jax.block_until_ready(model(X))

    assert out.shape == (B, 1, H, W)
    assert bool(jnp.all(jnp.isfinite(out)))

    ref = _usr_reference(X[:, 0], model.z_tab, model.natt_tab, model.smu_tab,
                         model.mask_fan)
    # tolerance covers the approx EUP reciprocal and transcendental impl deltas
    np.testing.assert_allclose(np.asarray(out[:, 0]), np.asarray(ref),
                               rtol=1e-2, atol=1e-4)
    print("KERNEL_OK")
</pallas_src>

<mosaic_0001>
module attributes {stable_mosaic.version = 11 : i64} {
  func.func @kernel(%arg0: i32, %arg1: memref<2x1x64x128xi32, #tpu.memory_space<vmem>>, %arg2: memref<64x64xf32, #tpu.memory_space<vmem>>, %arg3: memref<1x64x128xf32, #tpu.memory_space<vmem>>, %arg4: memref<64x1xf32, #tpu.memory_space<vmem>>, %arg5: memref<2x1x64x128xf32, #tpu.memory_space<vmem>>) attributes {dimension_semantics = [#tpu.dimension_semantics<parallel>], iteration_bounds = array<i64: 1>, scalar_prefetch = 0 : i64, scratch_operands = 0 : i64, tpu.core_type = #tpu.core_type<tc>, window_params = [{transform_indices = @transform_0, window_bounds = array<i64: 2, 1, 64, 128>}, {pipeline_mode = #tpu.pipeline_mode<synchronous>, transform_indices = @transform_1, window_bounds = array<i64: 64, 64>}, {pipeline_mode = #tpu.pipeline_mode<synchronous>, transform_indices = @transform_2, window_bounds = array<i64: 1, 64, 128>}, {pipeline_mode = #tpu.pipeline_mode<synchronous>, transform_indices = @transform_3, window_bounds = array<i64: 64, 1>}, {transform_indices = @transform_4, window_bounds = array<i64: 2, 1, 64, 128>}]} {
    %c0 = arith.constant 0 : index
    %c0_0 = arith.constant 0 : index
    %0 = vector.load %arg2[%c0, %c0_0] : memref<64x64xf32, #tpu.memory_space<vmem>>, vector<64x64xf32>
    %c0_1 = arith.constant 0 : index
    %c0_2 = arith.constant 0 : index
    %c0_3 = arith.constant 0 : index
    %1 = vector.load %arg3[%c0_1, %c0_2, %c0_3] : memref<1x64x128xf32, #tpu.memory_space<vmem>>, vector<1x64x128xf32>
    %2 = vector.shape_cast %1 : vector<1x64x128xf32> to vector<64x128xf32>
    %c0_4 = arith.constant 0 : index
    %c0_5 = arith.constant 0 : index
    %3 = vector.load %arg4[%c0_4, %c0_5] : memref<64x1xf32, #tpu.memory_space<vmem>>, vector<64x1xf32>
    %c0_6 = arith.constant 0 : index
    %c0_7 = arith.constant 0 : index
    %c0_8 = arith.constant 0 : index
    %c0_9 = arith.constant 0 : index
    %4 = vector.load %arg1[%c0_6, %c0_7, %c0_8, %c0_9] : memref<2x1x64x128xi32, #tpu.memory_space<vmem>>, vector<1x1x64x128xi32>
    %5 = vector.shape_cast %4 : vector<1x1x64x128xi32> to vector<64x128xi32>
    %cst = arith.constant 1.000000e+00 : f32
    %6 = vector.broadcast %cst : f32 to vector<64x128xf32>
    %cst_10 = arith.constant -0.00999999977 : f32
    %7 = vector.broadcast %cst_10 : f32 to vector<64x128xf32>
    %cst_11 = arith.constant 0.000000e+00 : f32
    %8 = vector.broadcast %cst_11 : f32 to vector<64x128xf32>
    %c1_i32 = arith.constant 1 : i32
    %9 = vector.broadcast %c1_i32 : i32 to vector<64x128xi32>
    %10 = arith.cmpi eq, %5, %9 : vector<64x128xi32>
    %cst_12 = arith.constant 1.500000e+00 : f32
    %11 = vector.broadcast %cst_12 : f32 to vector<64x128xf32>
    %12 = arith.select %10, %11, %6 : vector<64x128xi1>, vector<64x128xf32>
    %cst_13 = arith.constant -0.0249999985 : f32
    %13 = vector.broadcast %cst_13 : f32 to vector<64x128xf32>
    %14 = arith.select %10, %13, %7 : vector<64x128xi1>, vector<64x128xf32>
    %cst_14 = arith.constant 0.0150000006 : f32
    %15 = vector.broadcast %cst_14 : f32 to vector<64x128xf32>
    %16 = arith.select %10, %15, %8 : vector<64x128xi1>, vector<64x128xf32>
    %c2_i32 = arith.constant 2 : i32
    %17 = vector.broadcast %c2_i32 : i32 to vector<64x128xi32>
    %18 = arith.cmpi eq, %5, %17 : vector<64x128xi32>
    %cst_15 = arith.constant 2.000000e+00 : f32
    %19 = vector.broadcast %cst_15 : f32 to vector<64x128xf32>
    %20 = arith.select %18, %19, %12 : vector<64x128xi1>, vector<64x128xf32>
    %cst_16 = arith.constant -4.000000e-02 : f32
    %21 = vector.broadcast %cst_16 : f32 to vector<64x128xf32>
    %22 = arith.select %18, %21, %14 : vector<64x128xi1>, vector<64x128xf32>
    %cst_17 = arith.constant 0.0300000012 : f32
    %23 = vector.broadcast %cst_17 : f32 to vector<64x128xf32>
    %24 = arith.select %18, %23, %16 : vector<64x128xi1>, vector<64x128xf32>
    %c3_i32 = arith.constant 3 : i32
    %25 = vector.broadcast %c3_i32 : i32 to vector<64x128xi32>
    %26 = arith.cmpi eq, %5, %25 : vector<64x128xi32>
    %cst_18 = arith.constant 2.500000e+00 : f32
    %27 = vector.broadcast %cst_18 : f32 to vector<64x128xf32>
    %28 = arith.select %26, %27, %20 : vector<64x128xi1>, vector<64x128xf32>
    %cst_19 = arith.constant -5.500000e-02 : f32
    %29 = vector.broadcast %cst_19 : f32 to vector<64x128xf32>
    %30 = arith.select %26, %29, %22 : vector<64x128xi1>, vector<64x128xf32>
    %cst_20 = arith.constant 4.500000e-02 : f32
    %31 = vector.broadcast %cst_20 : f32 to vector<64x128xf32>
    %32 = arith.select %26, %31, %24 : vector<64x128xi1>, vector<64x128xf32>
    %c4_i32 = arith.constant 4 : i32
    %33 = vector.broadcast %c4_i32 : i32 to vector<64x128xi32>
    %34 = arith.cmpi eq, %5, %33 : vector<64x128xi32>
    %cst_21 = arith.constant 3.000000e+00 : f32
    %35 = vector.broadcast %cst_21 : f32 to vector<64x128xf32>
    %36 = arith.select %34, %35, %28 : vector<64x128xi1>, vector<64x128xf32>
    %cst_22 = arith.constant -7.000000e-02 : f32
    %37 = vector.broadcast %cst_22 : f32 to vector<64x128xf32>
    %38 = arith.select %34, %37, %30 : vector<64x128xi1>, vector<64x128xf32>
    %cst_23 = arith.constant 0.0600000024 : f32
    %39 = vector.broadcast %cst_23 : f32 to vector<64x128xf32>
    %40 = arith.select %34, %39, %32 : vector<64x128xi1>, vector<64x128xf32>
    %c5_i32 = arith.constant 5 : i32
    %41 = vector.broadcast %c5_i32 : i32 to vector<64x128xi32>
    %42 = arith.cmpi eq, %5, %41 : vector<64x128xi32>
    %cst_24 = arith.constant 3.500000e+00 : f32
    %43 = vector.broadcast %cst_24 : f32 to vector<64x128xf32>
    %44 = arith.select %42, %43, %36 : vector<64x128xi1>, vector<64x128xf32>
    %cst_25 = arith.constant -0.0849999934 : f32
    %45 = vector.broadcast %cst_25 : f32 to vector<64x128xf32>
    %46 = arith.select %42, %45, %38 : vector<64x128xi1>, vector<64x128xf32>
    %cst_26 = arith.constant 7.500000e-02 : f32
    %47 = vector.broadcast %cst_26 : f32 to vector<64x128xf32>
    %48 = arith.select %42, %47, %40 : vector<64x128xi1>, vector<64x128xf32>
    %c6_i32 = arith.constant 6 : i32
    %49 = vector.broadcast %c6_i32 : i32 to vector<64x128xi32>
    %50 = arith.cmpi eq, %5, %49 : vector<64x128xi32>
    %cst_27 = arith.constant 4.000000e+00 : f32
    %51 = vector.broadcast %cst_27 : f32 to vector<64x128xf32>
    %52 = arith.select %50, %51, %44 : vector<64x128xi1>, vector<64x128xf32>
    %cst_28 = arith.constant -0.099999994 : f32
    %53 = vector.broadcast %cst_28 : f32 to vector<64x128xf32>
    %54 = arith.select %50, %53, %46 : vector<64x128xi1>, vector<64x128xf32>
    %cst_29 = arith.constant 9.000000e-02 : f32
    %55 = vector.broadcast %cst_29 : f32 to vector<64x128xf32>
    %56 = arith.select %50, %55, %48 : vector<64x128xi1>, vector<64x128xf32>
    %c7_i32 = arith.constant 7 : i32
    %57 = vector.broadcast %c7_i32 : i32 to vector<64x128xi32>
    %58 = arith.cmpi eq, %5, %57 : vector<64x128xi32>
    %cst_30 = arith.constant 4.500000e+00 : f32
    %59 = vector.broadcast %cst_30 : f32 to vector<64x128xf32>
    %60 = arith.select %58, %59, %52 : vector<64x128xi1>, vector<64x128xf32>
    %cst_31 = arith.constant -0.114999995 : f32
    %61 = vector.broadcast %cst_31 : f32 to vector<64x128xf32>
    %62 = arith.select %58, %61, %54 : vector<64x128xi1>, vector<64x128xf32>
    %cst_32 = arith.constant 0.105000004 : f32
    %63 = vector.broadcast %cst_32 : f32 to vector<64x128xf32>
    %64 = arith.select %58, %63, %56 : vector<64x128xi1>, vector<64x128xf32>
    %c8_i32 = arith.constant 8 : i32
    %65 = vector.broadcast %c8_i32 : i32 to vector<64x128xi32>
    %66 = arith.cmpi eq, %5, %65 : vector<64x128xi32>
    %cst_33 = arith.constant 5.000000e+00 : f32
    %67 = vector.broadcast %cst_33 : f32 to vector<64x128xf32>
    %68 = arith.select %66, %67, %60 : vector<64x128xi1>, vector<64x128xf32>
    %cst_34 = arith.constant -1.300000e-01 : f32
    %69 = vector.broadcast %cst_34 : f32 to vector<64x128xf32>
    %70 = arith.select %66, %69, %62 : vector<64x128xi1>, vector<64x128xf32>
    %cst_35 = arith.constant 0.120000005 : f32
    %71 = vector.broadcast %cst_35 : f32 to vector<64x128xf32>
    %72 = arith.select %66, %71, %64 : vector<64x128xi1>, vector<64x128xf32>
    %c9_i32 = arith.constant 9 : i32
    %73 = vector.broadcast %c9_i32 : i32 to vector<64x128xi32>
    %74 = arith.cmpi eq, %5, %73 : vector<64x128xi32>
    %cst_36 = arith.constant 5.500000e+00 : f32
    %75 = vector.broadcast %cst_36 : f32 to vector<64x128xf32>
    %76 = arith.select %74, %75, %68 : vector<64x128xi1>, vector<64x128xf32>
    %cst_37 = arith.constant -1.450000e-01 : f32
    %77 = vector.broadcast %cst_37 : f32 to vector<64x128xf32>
    %78 = arith.select %74, %77, %70 : vector<64x128xi1>, vector<64x128xf32>
    %cst_38 = arith.constant 1.350000e-01 : f32
    %79 = vector.broadcast %cst_38 : f32 to vector<64x128xf32>
    %80 = arith.select %74, %79, %72 : vector<64x128xi1>, vector<64x128xf32>
    %c10_i32 = arith.constant 10 : i32
    %81 = vector.broadcast %c10_i32 : i32 to vector<64x128xi32>
    %82 = arith.cmpi eq, %5, %81 : vector<64x128xi32>
    %cst_39 = arith.constant 6.000000e+00 : f32
    %83 = vector.broadcast %cst_39 : f32 to vector<64x128xf32>
    %84 = arith.select %82, %83, %76 : vector<64x128xi1>, vector<64x128xf32>
    %cst_40 = arith.constant -1.600000e-01 : f32
    %85 = vector.broadcast %cst_40 : f32 to vector<64x128xf32>
    %86 = arith.select %82, %85, %78 : vector<64x128xi1>, vector<64x128xf32>
    %cst_41 = arith.constant 1.500000e-01 : f32
    %87 = vector.broadcast %cst_41 : f32 to vector<64x128xf32>
    %88 = arith.select %82, %87, %80 : vector<64x128xi1>, vector<64x128xf32>
    %c11_i32 = arith.constant 11 : i32
    %89 = vector.broadcast %c11_i32 : i32 to vector<64x128xi32>
    %90 = arith.cmpi eq, %5, %89 : vector<64x128xi32>
    %cst_42 = arith.constant 6.500000e+00 : f32
    %91 = vector.broadcast %cst_42 : f32 to vector<64x128xf32>
    %92 = arith.select %90, %91, %84 : vector<64x128xi1>, vector<64x128xf32>
    %cst_43 = arith.constant -1.750000e-01 : f32
    %93 = vector.broadcast %cst_43 : f32 to vector<64x128xf32>
    %94 = arith.select %90, %93, %86 : vector<64x128xi1>, vector<64x128xf32>
    %cst_44 = arith.constant 1.650000e-01 : f32
    %95 = vector.broadcast %cst_44 : f32 to vector<64x128xf32>
    %96 = arith.select %90, %95, %88 : vector<64x128xi1>, vector<64x128xf32>
    %c63_i32 = arith.constant 63 : i32
    %97 = tpu.dynamic_rotate %92 by %c63_i32 dim 0 : vector<64x128xf32>, i32 -> vector<64x128xf32>
    %98 = arith.subf %97, %92 : vector<64x128xf32>
    %99 = arith.addf %97, %92 : vector<64x128xf32>
    %cst_45 = arith.constant 9.99999997E-7 : f32
    %100 = vector.broadcast %cst_45 : f32 to vector<64x128xf32>
    %101 = arith.addf %99, %100 : vector<64x128xf32>
    %102 = tpu.reciprocal %101 {approx = true} : vector<64x128xf32> -> vector<64x128xf32>
    %103 = arith.mulf %98, %102 : vector<64x128xf32>
    %104 = arith.mulf %103, %103 : vector<64x128xf32>
    %105 = vector.broadcast %3 : vector<64x1xf32> to vector<64x128xf32>
    %106 = arith.mulf %104, %105 : vector<64x128xf32>
    %cst_46 = arith.constant 1.000000e+00 : f32
    %107 = vector.broadcast %cst_46 : f32 to vector<64x128xf32>
    %108 = arith.subf %107, %106 : vector<64x128xf32>
    %cst_47 = arith.constant 9.99999997E-7 : f32
    %109 = vector.broadcast %cst_47 : f32 to vector<64x128xf32>
    %110 = arith.maximumf %108, %109 : vector<64x128xf32>
    %111 = math.log %110 : vector<64x128xf32>
    %112 = arith.addf %94, %111 : vector<64x128xf32>
    %cst_48 = arith.constant dense<0.000000e+00> : vector<64x128xf32>
    %113 = tpu.matmul %0, %112, %cst_48 {dimension_numbers = #tpu.dot_dimension_numbers<[1], [0], [0], [1], [0, 0, 1, 1], [], []>} : vector<64x64xf32>, vector<64x128xf32>, vector<64x128xf32> -> vector<64x128xf32>
    %114 = arith.subf %113, %111 : vector<64x128xf32>
    %115 = math.exp %114 : vector<64x128xf32>
    %cst_49 = arith.constant 1.000000e+00 : f32
    %116 = vector.broadcast %cst_49 : f32 to vector<64x128xf32>
    %117 = arith.mulf %116, %106 : vector<64x128xf32>
    %118 = arith.addf %117, %96 : vector<64x128xf32>
    %119 = arith.mulf %115, %118 : vector<64x128xf32>
    %120 = arith.mulf %119, %2 : vector<64x128xf32>
    %c0_50 = arith.constant 0 : index
    %c0_51 = arith.constant 0 : index
    %c0_52 = arith.constant 0 : index
    %c0_53 = arith.constant 0 : index
    %121 = vector.load %arg5[%c0_50, %c0_51, %c0_52, %c0_53] : memref<2x1x64x128xf32, #tpu.memory_space<vmem>>, vector<1x1x64x128xf32>
    %122 = vector.shape_cast %121 : vector<1x1x64x128xf32> to vector<64x128xf32>
    %123 = vector.shape_cast %120 : vector<64x128xf32> to vector<1x1x64x128xf32>
    tpu.vector_store %arg5[%c0_50, %c0_51, %c0_52, %c0_53], %123 {strides = array<i32>} : memref<2x1x64x128xf32, #tpu.memory_space<vmem>>, vector<1x1x64x128xf32>,
    %c1 = arith.constant 1 : index
    %c0_54 = arith.constant 0 : index
    %c0_55 = arith.constant 0 : index
    %c0_56 = arith.constant 0 : index
    %124 = vector.load %arg1[%c1, %c0_54, %c0_55, %c0_56] : memref<2x1x64x128xi32, #tpu.memory_space<vmem>>, vector<1x1x64x128xi32>
    %125 = vector.shape_cast %124 : vector<1x1x64x128xi32> to vector<64x128xi32>
    %cst_57 = arith.constant 1.000000e+00 : f32
    %126 = vector.broadcast %cst_57 : f32 to vector<64x128xf32>
    %cst_58 = arith.constant -0.00999999977 : f32
    %127 = vector.broadcast %cst_58 : f32 to vector<64x128xf32>
    %cst_59 = arith.constant 0.000000e+00 : f32
    %128 = vector.broadcast %cst_59 : f32 to vector<64x128xf32>
    %c1_i32_60 = arith.constant 1 : i32
    %129 = vector.broadcast %c1_i32_60 : i32 to vector<64x128xi32>
    %130 = arith.cmpi eq, %125, %129 : vector<64x128xi32>
    %cst_61 = arith.constant 1.500000e+00 : f32
    %131 = vector.broadcast %cst_61 : f32 to vector<64x128xf32>
    %132 = arith.select %130, %131, %126 : vector<64x128xi1>, vector<64x128xf32>
    %cst_62 = arith.constant -0.0249999985 : f32
    %133 = vector.broadcast %cst_62 : f32 to vector<64x128xf32>
    %134 = arith.select %130, %133, %127 : vector<64x128xi1>, vector<64x128xf32>
    %cst_63 = arith.constant 0.0150000006 : f32
    %135 = vector.broadcast %cst_63 : f32 to vector<64x128xf32>
    %136 = arith.select %130, %135, %128 : vector<64x128xi1>, vector<64x128xf32>
    %c2_i32_64 = arith.constant 2 : i32
    %137 = vector.broadcast %c2_i32_64 : i32 to vector<64x128xi32>
    %138 = arith.cmpi eq, %125, %137 : vector<64x128xi32>
    %cst_65 = arith.constant 2.000000e+00 : f32
    %139 = vector.broadcast %cst_65 : f32 to vector<64x128xf32>
    %140 = arith.select %138, %139, %132 : vector<64x128xi1>, vector<64x128xf32>
    %cst_66 = arith.constant -4.000000e-02 : f32
    %141 = vector.broadcast %cst_66 : f32 to vector<64x128xf32>
    %142 = arith.select %138, %141, %134 : vector<64x128xi1>, vector<64x128xf32>
    %cst_67 = arith.constant 0.0300000012 : f32
    %143 = vector.broadcast %cst_67 : f32 to vector<64x128xf32>
    %144 = arith.select %138, %143, %136 : vector<64x128xi1>, vector<64x128xf32>
    %c3_i32_68 = arith.constant 3 : i32
    %145 = vector.broadcast %c3_i32_68 : i32 to vector<64x128xi32>
    %146 = arith.cmpi eq, %125, %145 : vector<64x128xi32>
    %cst_69 = arith.constant 2.500000e+00 : f32
    %147 = vector.broadcast %cst_69 : f32 to vector<64x128xf32>
    %148 = arith.select %146, %147, %140 : vector<64x128xi1>, vector<64x128xf32>
    %cst_70 = arith.constant -5.500000e-02 : f32
    %149 = vector.broadcast %cst_70 : f32 to vector<64x128xf32>
    %150 = arith.select %146, %149, %142 : vector<64x128xi1>, vector<64x128xf32>
    %cst_71 = arith.constant 4.500000e-02 : f32
    %151 = vector.broadcast %cst_71 : f32 to vector<64x128xf32>
    %152 = arith.select %146, %151, %144 : vector<64x128xi1>, vector<64x128xf32>
    %c4_i32_72 = arith.constant 4 : i32
    %153 = vector.broadcast %c4_i32_72 : i32 to vector<64x128xi32>
    %154 = arith.cmpi eq, %125, %153 : vector<64x128xi32>
    %cst_73 = arith.constant 3.000000e+00 : f32
    %155 = vector.broadcast %cst_73 : f32 to vector<64x128xf32>
    %156 = arith.select %154, %155, %148 : vector<64x128xi1>, vector<64x128xf32>
    %cst_74 = arith.constant -7.000000e-02 : f32
    %157 = vector.broadcast %cst_74 : f32 to vector<64x128xf32>
    %158 = arith.select %154, %157, %150 : vector<64x128xi1>, vector<64x128xf32>
    %cst_75 = arith.constant 0.0600000024 : f32
    %159 = vector.broadcast %cst_75 : f32 to vector<64x128xf32>
    %160 = arith.select %154, %159, %152 : vector<64x128xi1>, vector<64x128xf32>
    %c5_i32_76 = arith.constant 5 : i32
    %161 = vector.broadcast %c5_i32_76 : i32 to vector<64x128xi32>
    %162 = arith.cmpi eq, %125, %161 : vector<64x128xi32>
    %cst_77 = arith.constant 3.500000e+00 : f32
    %163 = vector.broadcast %cst_77 : f32 to vector<64x128xf32>
    %164 = arith.select %162, %163, %156 : vector<64x128xi1>, vector<64x128xf32>
    %cst_78 = arith.constant -0.0849999934 : f32
    %165 = vector.broadcast %cst_78 : f32 to vector<64x128xf32>
    %166 = arith.select %162, %165, %158 : vector<64x128xi1>, vector<64x128xf32>
    %cst_79 = arith.constant 7.500000e-02 : f32
    %167 = vector.broadcast %cst_79 : f32 to vector<64x128xf32>
    %168 = arith.select %162, %167, %160 : vector<64x128xi1>, vector<64x128xf32>
    %c6_i32_80 = arith.constant 6 : i32
    %169 = vector.broadcast %c6_i32_80 : i32 to vector<64x128xi32>
    %170 = arith.cmpi eq, %125, %169 : vector<64x128xi32>
    %cst_81 = arith.constant 4.000000e+00 : f32
    %171 = vector.broadcast %cst_81 : f32 to vector<64x128xf32>
    %172 = arith.select %170, %171, %164 : vector<64x128xi1>, vector<64x128xf32>
    %cst_82 = arith.constant -0.099999994 : f32
    %173 = vector.broadcast %cst_82 : f32 to vector<64x128xf32>
    %174 = arith.select %170, %173, %166 : vector<64x128xi1>, vector<64x128xf32>
    %cst_83 = arith.constant 9.000000e-02 : f32
    %175 = vector.broadcast %cst_83 : f32 to vector<64x128xf32>
    %176 = arith.select %170, %175, %168 : vector<64x128xi1>, vector<64x128xf32>
    %c7_i32_84 = arith.constant 7 : i32
    %177 = vector.broadcast %c7_i32_84 : i32 to vector<64x128xi32>
    %178 = arith.cmpi eq, %125, %177 : vector<64x128xi32>
    %cst_85 = arith.constant 4.500000e+00 : f32
    %179 = vector.broadcast %cst_85 : f32 to vector<64x128xf32>
    %180 = arith.select %178, %179, %172 : vector<64x128xi1>, vector<64x128xf32>
    %cst_86 = arith.constant -0.114999995 : f32
    %181 = vector.broadcast %cst_86 : f32 to vector<64x128xf32>
    %182 = arith.select %178, %181, %174 : vector<64x128xi1>, vector<64x128xf32>
    %cst_87 = arith.constant 0.105000004 : f32
    %183 = vector.broadcast %cst_87 : f32 to vector<64x128xf32>
    %184 = arith.select %178, %183, %176 : vector<64x128xi1>, vector<64x128xf32>
    %c8_i32_88 = arith.constant 8 : i32
    %185 = vector.broadcast %c8_i32_88 : i32 to vector<64x128xi32>
    %186 = arith.cmpi eq, %125, %185 : vector<64x128xi32>
    %cst_89 = arith.constant 5.000000e+00 : f32
    %187 = vector.broadcast %cst_89 : f32 to vector<64x128xf32>
    %188 = arith.select %186, %187, %180 : vector<64x128xi1>, vector<64x128xf32>
    %cst_90 = arith.constant -1.300000e-01 : f32
    %189 = vector.broadcast %cst_90 : f32 to vector<64x128xf32>
    %190 = arith.select %186, %189, %182 : vector<64x128xi1>, vector<64x128xf32>
    %cst_91 = arith.constant 0.120000005 : f32
    %191 = vector.broadcast %cst_91 : f32 to vector<64x128xf32>
    %192 = arith.select %186, %191, %184 : vector<64x128xi1>, vector<64x128xf32>
    %c9_i32_92 = arith.constant 9 : i32
    %193 = vector.broadcast %c9_i32_92 : i32 to vector<64x128xi32>
    %194 = arith.cmpi eq, %125, %193 : vector<64x128xi32>
    %cst_93 = arith.constant 5.500000e+00 : f32
    %195 = vector.broadcast %cst_93 : f32 to vector<64x128xf32>
    %196 = arith.select %194, %195, %188 : vector<64x128xi1>, vector<64x128xf32>
    %cst_94 = arith.constant -1.450000e-01 : f32
    %197 = vector.broadcast %cst_94 : f32 to vector<64x128xf32>
    %198 = arith.select %194, %197, %190 : vector<64x128xi1>, vector<64x128xf32>
    %cst_95 = arith.constant 1.350000e-01 : f32
    %199 = vector.broadcast %cst_95 : f32 to vector<64x128xf32>
    %200 = arith.select %194, %199, %192 : vector<64x128xi1>, vector<64x128xf32>
    %c10_i32_96 = arith.constant 10 : i32
    %201 = vector.broadcast %c10_i32_96 : i32 to vector<64x128xi32>
    %202 = arith.cmpi eq, %125, %201 : vector<64x128xi32>
    %cst_97 = arith.constant 6.000000e+00 : f32
    %203 = vector.broadcast %cst_97 : f32 to vector<64x128xf32>
    %204 = arith.select %202, %203, %196 : vector<64x128xi1>, vector<64x128xf32>
    %cst_98 = arith.constant -1.600000e-01 : f32
    %205 = vector.broadcast %cst_98 : f32 to vector<64x128xf32>
    %206 = arith.select %202, %205, %198 : vector<64x128xi1>, vector<64x128xf32>
    %cst_99 = arith.constant 1.500000e-01 : f32
    %207 = vector.broadcast %cst_99 : f32 to vector<64x128xf32>
    %208 = arith.select %202, %207, %200 : vector<64x128xi1>, vector<64x128xf32>
    %c11_i32_100 = arith.constant 11 : i32
    %209 = vector.broadcast %c11_i32_100 : i32 to vector<64x128xi32>
    %210 = arith.cmpi eq, %125, %209 : vector<64x128xi32>
    %cst_101 = arith.constant 6.500000e+00 : f32
    %211 = vector.broadcast %cst_101 : f32 to vector<64x128xf32>
    %212 = arith.select %210, %211, %204 : vector<64x128xi1>, vector<64x128xf32>
    %cst_102 = arith.constant -1.750000e-01 : f32
    %213 = vector.broadcast %cst_102 : f32 to vector<64x128xf32>
    %214 = arith.select %210, %213, %206 : vector<64x128xi1>, vector<64x128xf32>
    %cst_103 = arith.constant 1.650000e-01 : f32
    %215 = vector.broadcast %cst_103 : f32 to vector<64x128xf32>
    %216 = arith.select %210, %215, %208 : vector<64x128xi1>, vector<64x128xf32>
    %c63_i32_104 = arith.constant 63 : i32
    %217 = tpu.dynamic_rotate %212 by %c63_i32_104 dim 0 : vector<64x128xf32>, i32 -> vector<64x128xf32>
    %218 = arith.subf %217, %212 : vector<64x128xf32>
    %219 = arith.addf %217, %212 : vector<64x128xf32>
    %cst_105 = arith.constant 9.99999997E-7 : f32
    %220 = vector.broadcast %cst_105 : f32 to vector<64x128xf32>
    %221 = arith.addf %219, %220 : vector<64x128xf32>
    %222 = tpu.reciprocal %221 {approx = true} : vector<64x128xf32> -> vector<64x128xf32>
    %223 = arith.mulf %218, %222 : vector<64x128xf32>
    %224 = arith.mulf %223, %223 : vector<64x128xf32>
    %225 = vector.broadcast %3 : vector<64x1xf32> to vector<64x128xf32>
    %226 = arith.mulf %224, %225 : vector<64x128xf32>
    %cst_106 = arith.constant 1.000000e+00 : f32
    %227 = vector.broadcast %cst_106 : f32 to vector<64x128xf32>
    %228 = arith.subf %227, %226 : vector<64x128xf32>
    %cst_107 = arith.constant 9.99999997E-7 : f32
    %229 = vector.broadcast %cst_107 : f32 to vector<64x128xf32>
    %230 = arith.maximumf %228, %229 : vector<64x128xf32>
    %231 = math.log %230 : vector<64x128xf32>
    %232 = arith.addf %214, %231 : vector<64x128xf32>
    %cst_108 = arith.constant dense<0.000000e+00> : vector<64x128xf32>
    %233 = tpu.matmul %0, %232, %cst_108 {dimension_numbers = #tpu.dot_dimension_numbers<[1], [0], [0], [1], [0, 0, 1, 1], [], []>} : vector<64x64xf32>, vector<64x128xf32>, vector<64x128xf32> -> vector<64x128xf32>
    %234 = arith.subf %233, %231 : vector<64x128xf32>
    %235 = math.exp %234 : vector<64x128xf32>
    %cst_109 = arith.constant 1.000000e+00 : f32
    %236 = vector.broadcast %cst_109 : f32 to vector<64x128xf32>
    %237 = arith.mulf %236, %226 : vector<64x128xf32>
    %238 = arith.addf %237, %216 : vector<64x128xf32>
    %239 = arith.mulf %235, %238 : vector<64x128xf32>
    %240 = arith.mulf %239, %2 : vector<64x128xf32>
    %c1_110 = arith.constant 1 : index
    %c0_111 = arith.constant 0 : index
    %c0_112 = arith.constant 0 : index
    %c0_113 = arith.constant 0 : index
    %241 = vector.load %arg5[%c1_110, %c0_111, %c0_112, %c0_113] : memref<2x1x64x128xf32, #tpu.memory_space<vmem>>, vector<1x1x64x128xf32>
    %242 = vector.shape_cast %241 : vector<1x1x64x128xf32> to vector<64x128xf32>
    %243 = vector.shape_cast %240 : vector<64x128xf32> to vector<1x1x64x128xf32>
    tpu.vector_store %arg5[%c1_110, %c0_111, %c0_112, %c0_113], %243 {strides = array<i32>} : memref<2x1x64x128xf32, #tpu.memory_space<vmem>>, vector<1x1x64x128xf32>,
    return
  }
  func.func @transform_0(%arg0: i32) -> (i32, i32, i32, i32) {
    %c0_i32 = arith.constant 0 : i32
    %c0_i32_0 = arith.constant 0 : i32
    %c0_i32_1 = arith.constant 0 : i32
    %c0_i32_2 = arith.constant 0 : i32
    return %arg0, %c0_i32, %c0_i32_0, %c0_i32_1 : i32, i32, i32, i32
  }
  func.func @transform_1(%arg0: i32) -> (i32, i32) {
    %c0_i32 = arith.constant 0 : i32
    %c0_i32_0 = arith.constant 0 : i32
    %c0_i32_1 = arith.constant 0 : i32
    return %c0_i32, %c0_i32_0 : i32, i32
  }
  func.func @transform_2(%arg0: i32) -> (i32, i32, i32) {
    %c0_i32 = arith.constant 0 : i32
    %c0_i32_0 = arith.constant 0 : i32
    %c0_i32_1 = arith.constant 0 : i32
    %c0_i32_2 = arith.constant 0 : i32
    return %c0_i32, %c0_i32_0, %c0_i32_1 : i32, i32, i32
  }
  func.func @transform_3(%arg0: i32) -> (i32, i32) {
    %c0_i32 = arith.constant 0 : i32
    %c0_i32_0 = arith.constant 0 : i32
    %c0_i32_1 = arith.constant 0 : i32
    return %c0_i32, %c0_i32_0 : i32, i32
  }
  func.func @transform_4(%arg0: i32) -> (i32, i32, i32, i32) {
    %c0_i32 = arith.constant 0 : i32
    %c0_i32_0 = arith.constant 0 : i32
    %c0_i32_1 = arith.constant 0 : i32
    %c0_i32_2 = arith.constant 0 : i32
    return %arg0, %c0_i32, %c0_i32_0, %c0_i32_1 : i32, i32, i32, i32
  }
}

</mosaic_0001>

<llo_original>
// kernel: tpu_custom_call.1
$region0: #{tpu_custom_call.1}
  #allocation0 [shape = 'u32[]', space=smem, size = 0x4, offset = 0x4, fixed_abs, tag = 'smem constant byte address 0x4 - core index']
  #allocation1 [shape = 'u32[72,128]{1,0:T(1,128)}', space=vmem, size = 0x9000, scoped, tag = 'internal scratch']
  %s0 = inlined_call_operand.hbm [shape: s32[2,1,64,128], index: 0, kind: input, shape index: {}]
  %s1 = inlined_call_operand.vmem [shape: f32[64,64], index: 1, kind: input, shape index: {}]
  %s2 = inlined_call_operand.hbm [shape: f32[1,64,128], index: 2, kind: input, shape index: {}]
  %s3 = inlined_call_operand.vmem [shape: f32[64,1], index: 3, kind: input, shape index: {}]
  %s4 = inlined_call_operand.hbm [shape: f32[2,1,64,128], index: 4, kind: output, shape index: {}]
  %s5 = sld [smem:[#allocation0]]
  $region34: #{tpu_custom_call.1} parent=0
    _
  %s7 = ssub.s32 1, %s5
  %s8 = scalar_select 0, %s7, %s5
  $region1: #{tpu_custom_call.1} parent=0
    #allocation2 [shape = 'u8[65536]{0}', space=vmem, size = 0x10000, scoped, tag = 'input window, operand 0, single buffered']
    #allocation3 [shape = 's32[1]{0}', space=sflag, size = 0x4, scoped, tag = 'scoped memory for tpu_custom_call.1']
    #allocation4 [shape = 's32[1]{0}', space=sflag, size = 0x4, scoped, tag = 'scoped memory for tpu_custom_call.1']
    #allocation5 [shape = 'u8[32768]{0}', space=vmem, size = 0x8000, scoped, tag = 'input window, operand 2, single buffered']
    #allocation6 [shape = 's32[1]{0}', space=sflag, size = 0x4, scoped, tag = 'scoped memory for tpu_custom_call.1']
    #allocation7 [shape = 'u8[65536]{0}', space=vmem, size = 0x10000, scoped, tag = 'output window, operand 0, single buffered']
    %9 = vsyncpa [#allocation3], 0
    %10 = vsyncpa [#allocation6], 0
    %11 = vsyncpa [#allocation4], 0
    // Predicated region
    $region2: #{tpu_custom_call.1} parent=1 // pred_check
      _
    $region3: #{tpu_custom_call.1} parent=1 // pred_check_branch
      %13 = sbr.rel (0) target = $region5
    $region4: #{tpu_custom_call.1} parent=1 // pred_region
      %15 = vsyncadd [#allocation3], 0
      %s16 = sshll.u32 %s0, 4
      %s17 = int_to_ptr.hbm [resolvable:$true] %s16
      %s18 = sshll.u32 [#allocation2], 4
      %s19 = int_to_ptr.vmem [resolvable:$true] %s18
      %24 = dma.hbm_to_vmem [thread:$0]  %s17, 2048, %s19, [#allocation3], 128, 128, 8
    $region5: #{tpu_custom_call.1} parent=1 // pred_fallthru
      _
    // Predicated region
    $region6: #{tpu_custom_call.1} parent=1 // pred_check
      _
    $region7: #{tpu_custom_call.1} parent=1 // pred_check_branch
      %26 = sbr.rel (0) target = $region9
    $region8: #{tpu_custom_call.1} parent=1 // pred_region
      _
    $region9: #{tpu_custom_call.1} parent=1 // pred_fallthru
      _
    // Predicated region
    $region10: #{tpu_custom_call.1} parent=1 // pred_check
      _
    $region11: #{tpu_custom_call.1} parent=1 // pred_check_branch
      %28 = sbr.rel (0) target = $region13
    $region12: #{tpu_custom_call.1} parent=1 // pred_region
      %30 = vsyncadd [#allocation6], 0
      %s31 = sshll.u32 %s2, 4
      %s32 = int_to_ptr.hbm [resolvable:$true] %s31
      %s33 = sshll.u32 [#allocation5], 4
      %s34 = int_to_ptr.vmem [resolvable:$true] %s33
      %39 = dma.hbm_to_vmem [thread:$0]  %s32, 1024, %s34, [#allocation6], 128, 128, 8
    $region13: #{tpu_custom_call.1} parent=1 // pred_fallthru
      _
    // Predicated region
    $region14: #{tpu_custom_call.1} parent=1 // pred_check
      _
    $region15: #{tpu_custom_call.1} parent=1 // pred_check_branch
      %41 = sbr.rel (0) target = $region17
    $region16: #{tpu_custom_call.1} parent=1 // pred_region
      _
    $region17: #{tpu_custom_call.1} parent=1 // pred_fallthru
      _
    // Predicated region
    $region18: #{tpu_custom_call.1} parent=1 // pred_check
      _
    $region19: #{tpu_custom_call.1} parent=1 // pred_check_branch
      %43 = sbr.rel (0) target = $region21
    $region20: #{tpu_custom_call.1} parent=1 // pred_region
      %45 = dma.done [#allocation3], 2048
    $region21: #{tpu_custom_call.1} parent=1 // pred_fallthru
      _
    // Predicated region
    $region22: #{tpu_custom_call.1} parent=1 // pred_check
      _
    $region23: #{tpu_custom_call.1} parent=1 // pred_check_branch
      %47 = sbr.rel (0) target = $region25
    $region24: #{tpu_custom_call.1} parent=1 // pred_region
      %49 = dma.done [#allocation6], 1024
    $region25: #{tpu_custom_call.1} parent=1 // pred_fallthru
      _
    %v50 = vld [vmem:[%s1] sm:$0xff]
    %v51 = vld [vmem:[%s1 + $0x8] sm:$0xff]
    %v52 = vld [vmem:[%s1 + $0x10] sm:$0xff]
    %v53 = vld [vmem:[%s1 + $0x18] sm:$0xff]
    %v54 = vld [vmem:[%s1 + $0x20] sm:$0xff]
    %v55 = vld [vmem:[%s1 + $0x28] sm:$0xff]
    %v56 = vld [vmem:[%s1 + $0x30] sm:$0xff]
    %v57 = vld [vmem:[%s1 + $0x38] sm:$0xff]
    %v58 = vld [vmem:[#allocation5] sm:$0xff]
    %v59 = vld [vmem:[#allocation5 + $0x8] sm:$0xff]
    %v60 = vld [vmem:[#allocation5 + $0x10] sm:$0xff]
    %v61 = vld [vmem:[#allocation5 + $0x18] sm:$0xff]
    %v62 = vld [vmem:[#allocation5 + $0x20] sm:$0xff]
    %v63 = vld [vmem:[#allocation5 + $0x28] sm:$0xff]
    %v64 = vld [vmem:[#allocation5 + $0x30] sm:$0xff]
    %v65 = vld [vmem:[#allocation5 + $0x38] sm:$0xff]
    %v66 = vld [vmem:[%s3] sm:$0xff]
    %v67 = vld [vmem:[%s3 + $0x8] sm:$0xff]
    %v68 = vld [vmem:[%s3 + $0x10] sm:$0xff]
    %v69 = vld [vmem:[%s3 + $0x18] sm:$0xff]
    %v70 = vld [vmem:[%s3 + $0x20] sm:$0xff]
    %v71 = vld [vmem:[%s3 + $0x28] sm:$0xff]
    %v72 = vld [vmem:[%s3 + $0x30] sm:$0xff]
    %v73 = vld [vmem:[%s3 + $0x38] sm:$0xff]
    %v74 = vld [vmem:[#allocation2] sm:$0xff]
    %v75 = vld [vmem:[#allocation2 + $0x8] sm:$0xff]
    %v76 = vld [vmem:[#allocation2 + $0x10] sm:$0xff]
    %v77 = vld [vmem:[#allocation2 + $0x18] sm:$0xff]
    %v78 = vld [vmem:[#allocation2 + $0x20] sm:$0xff]
    %v79 = vld [vmem:[#allocation2 + $0x28] sm:$0xff]
    %v80 = vld [vmem:[#allocation2 + $0x30] sm:$0xff]
    %v81 = vld [vmem:[#allocation2 + $0x38] sm:$0xff]
    %vm82 = vcmp.eq.s32.totalorder %v74, 1
    %vm83 = vcmp.eq.s32.totalorder %v75, 1
    %vm84 = vcmp.eq.s32.totalorder %v76, 1
    %vm85 = vcmp.eq.s32.totalorder %v77, 1
    %vm86 = vcmp.eq.s32.totalorder %v78, 1
    %vm87 = vcmp.eq.s32.totalorder %v79, 1
    %vm88 = vcmp.eq.s32.totalorder %v80, 1
    %vm89 = vcmp.eq.s32.totalorder %v81, 1
    %v90 = vsel %vm82, 1.5, 1.0
    %v91 = vsel %vm83, 1.5, 1.0
    %v92 = vsel %vm84, 1.5, 1.0
    %v93 = vsel %vm85, 1.5, 1.0
    %v94 = vsel %vm86, 1.5, 1.0
    %v95 = vsel %vm87, 1.5, 1.0
    %v96 = vsel %vm88, 1.5, 1.0
    %v97 = vsel %vm89, 1.5, 1.0
    %v98 = vsel %vm82, -0.024999999, -0.01
    %v99 = vsel %vm83, -0.024999999, -0.01
    %v100 = vsel %vm84, -0.024999999, -0.01
    %v101 = vsel %vm85, -0.024999999, -0.01
    %v102 = vsel %vm86, -0.024999999, -0.01
    %v103 = vsel %vm87, -0.024999999, -0.01
    %v104 = vsel %vm88, -0.024999999, -0.01
    %v105 = vsel %vm89, -0.024999999, -0.01
    %v106 = vsel %vm82, 0.015000001, 0.0
    %v107 = vsel %vm83, 0.015000001, 0.0
    %v108 = vsel %vm84, 0.015000001, 0.0
    %v109 = vsel %vm85, 0.015000001, 0.0
    %v110 = vsel %vm86, 0.015000001, 0.0
    %v111 = vsel %vm87, 0.015000001, 0.0
    %v112 = vsel %vm88, 0.015000001, 0.0
    %v113 = vsel %vm89, 0.015000001, 0.0
    %vm114 = vcmp.eq.s32.totalorder %v74, 2
    %vm115 = vcmp.eq.s32.totalorder %v75, 2
    %vm116 = vcmp.eq.s32.totalorder %v76, 2
    %vm117 = vcmp.eq.s32.totalorder %v77, 2
    %vm118 = vcmp.eq.s32.totalorder %v78, 2
    %vm119 = vcmp.eq.s32.totalorder %v79, 2
    %vm120 = vcmp.eq.s32.totalorder %v80, 2
    %vm121 = vcmp.eq.s32.totalorder %v81, 2
    %v122 = vsel %vm114, 2.0, %v90
    %v123 = vsel %vm115, 2.0, %v91
    %v124 = vsel %vm116, 2.0, %v92
    %v125 = vsel %vm117, 2.0, %v93
    %v126 = vsel %vm118, 2.0, %v94
    %v127 = vsel %vm119, 2.0, %v95
    %v128 = vsel %vm120, 2.0, %v96
    %v129 = vsel %vm121, 2.0, %v97
    %v130 = vsel %vm114, -0.04, %v98
    %v131 = vsel %vm115, -0.04, %v99
    %v132 = vsel %vm116, -0.04, %v100
    %v133 = vsel %vm117, -0.04, %v101
    %v134 = vsel %vm118, -0.04, %v102
    %v135 = vsel %vm119, -0.04, %v103
    %v136 = vsel %vm120, -0.04, %v104
    %v137 = vsel %vm121, -0.04, %v105
    %v138 = vsel %vm114, 0.030000001, %v106
    %v139 = vsel %vm115, 0.030000001, %v107
    %v140 = vsel %vm116, 0.030000001, %v108
    %v141 = vsel %vm117, 0.030000001, %v109
    %v142 = vsel %vm118, 0.030000001, %v110
    %v143 = vsel %vm119, 0.030000001, %v111
    %v144 = vsel %vm120, 0.030000001, %v112
    %v145 = vsel %vm121, 0.030000001, %v113
    %vm146 = vcmp.eq.s32.totalorder %v74, 3
    %vm147 = vcmp.eq.s32.totalorder %v75, 3
    %vm148 = vcmp.eq.s32.totalorder %v76, 3
    %vm149 = vcmp.eq.s32.totalorder %v77, 3
    %vm150 = vcmp.eq.s32.totalorder %v78, 3
    %vm151 = vcmp.eq.s32.totalorder %v79, 3
    %vm152 = vcmp.eq.s32.totalorder %v80, 3
    %vm153 = vcmp.eq.s32.totalorder %v81, 3
    %v154 = vsel %vm146, 2.5, %v122
    %v155 = vsel %vm147, 2.5, %v123
    %v156 = vsel %vm148, 2.5, %v124
    %v157 = vsel %vm149, 2.5, %v125
    %v158 = vsel %vm150, 2.5, %v126
    %v159 = vsel %vm151, 2.5, %v127
    %v160 = vsel %vm152, 2.5, %v128
    %v161 = vsel %vm153, 2.5, %v129
    %v162 = vsel %vm146, -0.055, %v130
    %v163 = vsel %vm147, -0.055, %v131
    %v164 = vsel %vm148, -0.055, %v132
    %v165 = vsel %vm149, -0.055, %v133
    %v166 = vsel %vm150, -0.055, %v134
    %v167 = vsel %vm151, -0.055, %v135
    %v168 = vsel %vm152, -0.055, %v136
    %v169 = vsel %vm153, -0.055, %v137
    %v170 = vsel %vm146, 0.045, %v138
    %v171 = vsel %vm147, 0.045, %v139
    %v172 = vsel %vm148, 0.045, %v140
    %v173 = vsel %vm149, 0.045, %v141
    %v174 = vsel %vm150, 0.045, %v142
    %v175 = vsel %vm151, 0.045, %v143
    %v176 = vsel %vm152, 0.045, %v144
    %v177 = vsel %vm153, 0.045, %v145
    %vm178 = vcmp.eq.s32.totalorder %v74, 4
    %vm179 = vcmp.eq.s32.totalorder %v75, 4
    %vm180 = vcmp.eq.s32.totalorder %v76, 4
    %vm181 = vcmp.eq.s32.totalorder %v77, 4
    %vm182 = vcmp.eq.s32.totalorder %v78, 4
    %vm183 = vcmp.eq.s32.totalorder %v79, 4
    %vm184 = vcmp.eq.s32.totalorder %v80, 4
    %vm185 = vcmp.eq.s32.totalorder %v81, 4
    %v186 = vsel %vm178, 3.0, %v154
    %v187 = vsel %vm179, 3.0, %v155
    %v188 = vsel %vm180, 3.0, %v156
    %v189 = vsel %vm181, 3.0, %v157
    %v190 = vsel %vm182, 3.0, %v158
    %v191 = vsel %vm183, 3.0, %v159
    %v192 = vsel %vm184, 3.0, %v160
    %v193 = vsel %vm185, 3.0, %v161
    %v194 = vsel %vm178, -0.07, %v162
    %v195 = vsel %vm179, -0.07, %v163
    %v196 = vsel %vm180, -0.07, %v164
    %v197 = vsel %vm181, -0.07, %v165
    %v198 = vsel %vm182, -0.07, %v166
    %v199 = vsel %vm183, -0.07, %v167
    %v200 = vsel %vm184, -0.07, %v168
    %v201 = vsel %vm185, -0.07, %v169
    %v202 = vsel %vm178, 0.060000002, %v170
    %v203 = vsel %vm179, 0.060000002, %v171
    %v204 = vsel %vm180, 0.060000002, %v172
    %v205 = vsel %vm181, 0.060000002, %v173
    %v206 = vsel %vm182, 0.060000002, %v174
    %v207 = vsel %vm183, 0.060000002, %v175
    %v208 = vsel %vm184, 0.060000002, %v176
    %v209 = vsel %vm185, 0.060000002, %v177
    %vm210 = vcmp.eq.s32.totalorder %v74, 5
    %vm211 = vcmp.eq.s32.totalorder %v75, 5
    %vm212 = vcmp.eq.s32.totalorder %v76, 5
    %vm213 = vcmp.eq.s32.totalorder %v77, 5
    %vm214 = vcmp.eq.s32.totalorder %v78, 5
    %vm215 = vcmp.eq.s32.totalorder %v79, 5
    %vm216 = vcmp.eq.s32.totalorder %v80, 5
    %vm217 = vcmp.eq.s32.totalorder %v81, 5
    %v218 = vsel %vm210, 3.5, %v186
    %v219 = vsel %vm211, 3.5, %v187
    %v220 = vsel %vm212, 3.5, %v188
    %v221 = vsel %vm213, 3.5, %v189
    %v222 = vsel %vm214, 3.5, %v190
    %v223 = vsel %vm215, 3.5, %v191
    %v224 = vsel %vm216, 3.5, %v192
    %v225 = vsel %vm217, 3.5, %v193
    %v226 = vsel %vm210, -0.08499999, %v194
    %v227 = vsel %vm211, -0.08499999, %v195
    %v228 = vsel %vm212, -0.08499999, %v196
    %v229 = vsel %vm213, -0.08499999, %v197
    %v230 = vsel %vm214, -0.08499999, %v198
    %v231 = vsel %vm215, -0.08499999, %v199
    %v232 = vsel %vm216, -0.08499999, %v200
    %v233 = vsel %vm217, -0.08499999, %v201
    %v234 = vsel %vm210, 0.075, %v202
    %v235 = vsel %vm211, 0.075, %v203
    %v236 = vsel %vm212, 0.075, %v204
    %v237 = vsel %vm213, 0.075, %v205
    %v238 = vsel %vm214, 0.075, %v206
    %v239 = vsel %vm215, 0.075, %v207
    %v240 = vsel %vm216, 0.075, %v208
    %v241 = vsel %vm217, 0.075, %v209
    %vm242 = vcmp.eq.s32.totalorder %v74, 6
    %vm243 = vcmp.eq.s32.totalorder %v75, 6
    %vm244 = vcmp.eq.s32.totalorder %v76, 6
    %vm245 = vcmp.eq.s32.totalorder %v77, 6
    %vm246 = vcmp.eq.s32.totalorder %v78, 6
    %vm247 = vcmp.eq.s32.totalorder %v79, 6
    %vm248 = vcmp.eq.s32.totalorder %v80, 6
    %vm249 = vcmp.eq.s32.totalorder %v81, 6
    %v250 = vsel %vm242, 4.0, %v218
    %v251 = vsel %vm243, 4.0, %v219
    %v252 = vsel %vm244, 4.0, %v220
    %v253 = vsel %vm245, 4.0, %v221
    %v254 = vsel %vm246, 4.0, %v222
    %v255 = vsel %vm247, 4.0, %v223
    %v256 = vsel %vm248, 4.0, %v224
    %v257 = vsel %vm249, 4.0, %v225
    %v258 = vsel %vm242, -0.099999994, %v226
    %v259 = vsel %vm243, -0.099999994, %v227
    %v260 = vsel %vm244, -0.099999994, %v228
    %v261 = vsel %vm245, -0.099999994, %v229
    %v262 = vsel %vm246, -0.099999994, %v230
    %v263 = vsel %vm247, -0.099999994, %v231
    %v264 = vsel %vm248, -0.099999994, %v232
    %v265 = vsel %vm249, -0.099999994, %v233
    %v266 = vsel %vm242, 0.09, %v234
    %v267 = vsel %vm243, 0.09, %v235
    %v268 = vsel %vm244, 0.09, %v236
    %v269 = vsel %vm245, 0.09, %v237
    %v270 = vsel %vm246, 0.09, %v238
    %v271 = vsel %vm247, 0.09, %v239
    %v272 = vsel %vm248, 0.09, %v240
    %v273 = vsel %vm249, 0.09, %v241
    %vm274 = vcmp.eq.s32.totalorder %v74, 7
    %vm275 = vcmp.eq.s32.totalorder %v75, 7
    %vm276 = vcmp.eq.s32.totalorder %v76, 7
    %vm277 = vcmp.eq.s32.totalorder %v77, 7
    %vm278 = vcmp.eq.s32.totalorder %v78, 7
    %vm279 = vcmp.eq.s32.totalorder %v79, 7
    %vm280 = vcmp.eq.s32.totalorder %v80, 7
    %vm281 = vcmp.eq.s32.totalorder %v81, 7
    %v282 = vsel %vm274, 4.5, %v250
    %v283 = vsel %vm275, 4.5, %v251
    %v284 = vsel %vm276, 4.5, %v252
    %v285 = vsel %vm277, 4.5, %v253
    %v286 = vsel %vm278, 4.5, %v254
    %v287 = vsel %vm279, 4.5, %v255
    %v288 = vsel %vm280, 4.5, %v256
    %v289 = vsel %vm281, 4.5, %v257
    %v290 = vsel %vm274, -0.114999995, %v258
    %v291 = vsel %vm275, -0.114999995, %v259
    %v292 = vsel %vm276, -0.114999995, %v260
    %v293 = vsel %vm277, -0.114999995, %v261
    %v294 = vsel %vm278, -0.114999995, %v262
    %v295 = vsel %vm279, -0.114999995, %v263
    %v296 = vsel %vm280, -0.114999995, %v264
    %v297 = vsel %vm281, -0.114999995, %v265
    %v298 = vsel %vm274, 0.105000004, %v266
    %v299 = vsel %vm275, 0.105000004, %v267
    %v300 = vsel %vm276, 0.105000004, %v268
    %v301 = vsel %vm277, 0.105000004, %v269
    %v302 = vsel %vm278, 0.105000004, %v270
    %v303 = vsel %vm279, 0.105000004, %v271
    %v304 = vsel %vm280, 0.105000004, %v272
    %v305 = vsel %vm281, 0.105000004, %v273
    %vm306 = vcmp.eq.s32.totalorder %v74, 8
    %vm307 = vcmp.eq.s32.totalorder %v75, 8
    %vm308 = vcmp.eq.s32.totalorder %v76, 8
    %vm309 = vcmp.eq.s32.totalorder %v77, 8
    %vm310 = vcmp.eq.s32.totalorder %v78, 8
    %vm311 = vcmp.eq.s32.totalorder %v79, 8
    %vm312 = vcmp.eq.s32.totalorder %v80, 8
    %vm313 = vcmp.eq.s32.totalorder %v81, 8
    %v314 = vsel %vm306, 5.0, %v282
    %v315 = vsel %vm307, 5.0, %v283
    %v316 = vsel %vm308, 5.0, %v284
    %v317 = vsel %vm309, 5.0, %v285
    %v318 = vsel %vm310, 5.0, %v286
    %v319 = vsel %vm311, 5.0, %v287
    %v320 = vsel %vm312, 5.0, %v288
    %v321 = vsel %vm313, 5.0, %v289
    %v322 = vsel %vm306, -0.13, %v290
    %v323 = vsel %vm307, -0.13, %v291
    %v324 = vsel %vm308, -0.13, %v292
    %v325 = vsel %vm309, -0.13, %v293
    %v326 = vsel %vm310, -0.13, %v294
    %v327 = vsel %vm311, -0.13, %v295
    %v328 = vsel %vm312, -0.13, %v296
    %v329 = vsel %vm313, -0.13, %v297
    %v330 = vsel %vm306, 0.120000005, %v298
    %v331 = vsel %vm307, 0.120000005, %v299
    %v332 = vsel %vm308, 0.120000005, %v300
    %v333 = vsel %vm309, 0.120000005, %v301
    %v334 = vsel %vm310, 0.120000005, %v302
    %v335 = vsel %vm311, 0.120000005, %v303
    %v336 = vsel %vm312, 0.120000005, %v304
    %v337 = vsel %vm313, 0.120000005, %v305
    %vm338 = vcmp.eq.s32.totalorder %v74, 9
    %vm339 = vcmp.eq.s32.totalorder %v75, 9
    %vm340 = vcmp.eq.s32.totalorder %v76, 9
    %vm341 = vcmp.eq.s32.totalorder %v77, 9
    %vm342 = vcmp.eq.s32.totalorder %v78, 9
    %vm343 = vcmp.eq.s32.totalorder %v79, 9
    %vm344 = vcmp.eq.s32.totalorder %v80, 9
    %vm345 = vcmp.eq.s32.totalorder %v81, 9
    %v346 = vsel %vm338, 5.5, %v314
    %v347 = vsel %vm339, 5.5, %v315
    %v348 = vsel %vm340, 5.5, %v316
    %v349 = vsel %vm341, 5.5, %v317
    %v350 = vsel %vm342, 5.5, %v318
    %v351 = vsel %vm343, 5.5, %v319
    %v352 = vsel %vm344, 5.5, %v320
    %v353 = vsel %vm345, 5.5, %v321
    %v354 = vsel %vm338, -0.145, %v322
    %v355 = vsel %vm339, -0.145, %v323
    %v356 = vsel %vm340, -0.145, %v324
    %v357 = vsel %vm341, -0.145, %v325
    %v358 = vsel %vm342, -0.145, %v326
    %v359 = vsel %vm343, -0.145, %v327
    %v360 = vsel %vm344, -0.145, %v328
    %v361 = vsel %vm345, -0.145, %v329
    %v362 = vsel %vm338, 0.135, %v330
    %v363 = vsel %vm339, 0.135, %v331
    %v364 = vsel %vm340, 0.135, %v332
    %v365 = vsel %vm341, 0.135, %v333
    %v366 = vsel %vm342, 0.135, %v334
    %v367 = vsel %vm343, 0.135, %v335
    %v368 = vsel %vm344, 0.135, %v336
    %v369 = vsel %vm345, 0.135, %v337
    %vm370 = vcmp.eq.s32.totalorder %v74, 10
    %vm371 = vcmp.eq.s32.totalorder %v75, 10
    %vm372 = vcmp.eq.s32.totalorder %v76, 10
    %vm373 = vcmp.eq.s32.totalorder %v77, 10
    %vm374 = vcmp.eq.s32.totalorder %v78, 10
    %vm375 = vcmp.eq.s32.totalorder %v79, 10
    %vm376 = vcmp.eq.s32.totalorder %v80, 10
    %vm377 = vcmp.eq.s32.totalorder %v81, 10
    %v378 = vsel %vm370, 6.0, %v346
    %v379 = vsel %vm371, 6.0, %v347
    %v380 = vsel %vm372, 6.0, %v348
    %v381 = vsel %vm373, 6.0, %v349
    %v382 = vsel %vm374, 6.0, %v350
    %v383 = vsel %vm375, 6.0, %v351
    %v384 = vsel %vm376, 6.0, %v352
    %v385 = vsel %vm377, 6.0, %v353
    %v386 = vsel %vm370, -0.16, %v354
    %v387 = vsel %vm371, -0.16, %v355
    %v388 = vsel %vm372, -0.16, %v356
    %v389 = vsel %vm373, -0.16, %v357
    %v390 = vsel %vm374, -0.16, %v358
    %v391 = vsel %vm375, -0.16, %v359
    %v392 = vsel %vm376, -0.16, %v360
    %v393 = vsel %vm377, -0.16, %v361
    %v394 = vsel %vm370, 0.15, %v362
    %v395 = vsel %vm371, 0.15, %v363
    %v396 = vsel %vm372, 0.15, %v364
    %v397 = vsel %vm373, 0.15, %v365
    %v398 = vsel %vm374, 0.15, %v366
    %v399 = vsel %vm375, 0.15, %v367
    %v400 = vsel %vm376, 0.15, %v368
    %v401 = vsel %vm377, 0.15, %v369
    %vm402 = vcmp.eq.s32.totalorder %v74, 11
    %vm403 = vcmp.eq.s32.totalorder %v75, 11
    %vm404 = vcmp.eq.s32.totalorder %v76, 11
    %vm405 = vcmp.eq.s32.totalorder %v77, 11
    %vm406 = vcmp.eq.s32.totalorder %v78, 11
    %vm407 = vcmp.eq.s32.totalorder %v79, 11
    %vm408 = vcmp.eq.s32.totalorder %v80, 11
    %vm409 = vcmp.eq.s32.totalorder %v81, 11
    %v410 = vsel %vm402, 6.5, %v378
    %v411 = vsel %vm403, 6.5, %v379
    %v412 = vsel %vm404, 6.5, %v380
    %v413 = vsel %vm405, 6.5, %v381
    %v414 = vsel %vm406, 6.5, %v382
    %v415 = vsel %vm407, 6.5, %v383
    %v416 = vsel %vm408, 6.5, %v384
    %v417 = vsel %vm409, 6.5, %v385
    %v418 = vsel %vm402, -0.175, %v386
    %v419 = vsel %vm403, -0.175, %v387
    %v420 = vsel %vm404, -0.175, %v388
    %v421 = vsel %vm405, -0.175, %v389
    %v422 = vsel %vm406, -0.175, %v390
    %v423 = vsel %vm407, -0.175, %v391
    %v424 = vsel %vm408, -0.175, %v392
    %v425 = vsel %vm409, -0.175, %v393
    %v426 = vsel %vm402, 0.165, %v394
    %v427 = vsel %vm403, 0.165, %v395
    %v428 = vsel %vm404, 0.165, %v396
    %v429 = vsel %vm405, 0.165, %v397
    %v430 = vsel %vm406, 0.165, %v398
    %v431 = vsel %vm407, 0.165, %v399
    %v432 = vsel %vm408, 0.165, %v400
    %v433 = vsel %vm409, 0.165, %v401
    %v434 = vrot.slane %v410, 1
    %v435 = vrot.slane %v411, 1
    %v436 = vrot.slane %v412, 1
    %v437 = vrot.slane %v413, 1
    %v438 = vrot.slane %v414, 1
    %v439 = vrot.slane %v415, 1
    %v440 = vrot.slane %v416, 1
    %v441 = vrot.slane %v417, 1
    %v442 = vlaneseq
    %v443 = vshrl.u32 %v442, 7
    %vm444 = vcmp.lt.s32.totalorder %v443, 7
    %v445 = vsel %vm444, %v440, %v441
    %v446 = vsel %vm444, %v439, %v440
    %v447 = vsel %vm444, %v438, %v439
    %v448 = vsel %vm444, %v437, %v438
    %v449 = vsel %vm444, %v436, %v437
    %v450 = vsel %vm444, %v435, %v436
    %v451 = vsel %vm444, %v434, %v435
    %v452 = vsel %vm444, %v441, %v434
    %v453 = vsub.f32 %v451, %v410
    %v454 = vsub.f32 %v450, %v411
    %v455 = vsub.f32 %v449, %v412
    %v456 = vsub.f32 %v448, %v413
    %v457 = vsub.f32 %v447, %v414
    %v458 = vsub.f32 %v446, %v415
    %v459 = vsub.f32 %v445, %v416
    %v460 = vsub.f32 %v452, %v417
    %v461 = vadd.f32 %v451, %v410
    %v462 = vadd.f32 %v450, %v411
    %v463 = vadd.f32 %v449, %v412
    %v464 = vadd.f32 %v448, %v413
    %v465 = vadd.f32 %v447, %v414
    %v466 = vadd.f32 %v446, %v415
    %v467 = vadd.f32 %v445, %v416
    %v468 = vadd.f32 %v452, %v417
    %v469 = vadd.f32 %v461, 1e-06
    %v470 = vadd.f32 %v462, 1e-06
    %v471 = vadd.f32 %v463, 1e-06
    %v472 = vadd.f32 %v464, 1e-06
    %v473 = vadd.f32 %v465, 1e-06
    %v474 = vadd.f32 %v466, 1e-06
    %v475 = vadd.f32 %v467, 1e-06
    %v476 = vadd.f32 %v468, 1e-06
    %v477 = vrcp.pop %v469
    %v478 = vrcp.pop %v470
    %v479 = vrcp.pop %v471
    %v480 = vrcp.pop %v472
    %v481 = vrcp.pop %v473
    %v482 = vrcp.pop %v474
    %v483 = vrcp.pop %v475
    %v484 = vrcp.pop %v476
    %v485 = vmul.f32 %v453, %v477
    %v486 = vmul.f32 %v454, %v478
    %v487 = vmul.f32 %v455, %v479
    %v488 = vmul.f32 %v456, %v480
    %v489 = vmul.f32 %v457, %v481
    %v490 = vmul.f32 %v458, %v482
    %v491 = vmul.f32 %v459, %v483
    %v492 = vmul.f32 %v460, %v484
    %v493 = vmul.f32 %v485, %v485
    %v494 = vmul.f32 %v486, %v486
    %v495 = vmul.f32 %v487, %v487
    %v496 = vmul.f32 %v488, %v488
    %v497 = vmul.f32 %v489, %v489
    %v498 = vmul.f32 %v490, %v490
    %v499 = vmul.f32 %v491, %v491
    %v500 = vmul.f32 %v492, %v492
    %502 = vset.pattern.permute.xlu0 0
    %503 = vperm.xlu0 %502, %v66
    %v504 = vpop.permute.xlu0 %503
    %507 = vset.pattern.permute.xlu0 0
    %508 = vperm.xlu0 %507, %v67
    %v509 = vpop.permute.xlu0 %508
    %512 = vset.pattern.permute.xlu0 0
    %513 = vperm.xlu0 %512, %v68
    %v514 = vpop.permute.xlu0 %513
    %517 = vset.pattern.permute.xlu0 0
    %518 = vperm.xlu0 %517, %v69
    %v519 = vpop.permute.xlu0 %518
    %522 = vset.pattern.permute.xlu0 0
    %523 = vperm.xlu0 %522, %v70
    %v524 = vpop.permute.xlu0 %523
    %527 = vset.pattern.permute.xlu0 0
    %528 = vperm.xlu0 %527, %v71
    %v529 = vpop.permute.xlu0 %528
    %532 = vset.pattern.permute.xlu0 0
    %533 = vperm.xlu0 %532, %v72
    %v534 = vpop.permute.xlu0 %533
    %537 = vset.pattern.permute.xlu0 0
    %538 = vperm.xlu0 %537, %v73
    %v539 = vpop.permute.xlu0 %538
    %v541 = vmul.f32 %v493, %v504
    %v542 = vmul.f32 %v494, %v509
    %v543 = vmul.f32 %v495, %v514
    %v544 = vmul.f32 %v496, %v519
    %v545 = vmul.f32 %v497, %v524
    %v546 = vmul.f32 %v498, %v529
    %v547 = vmul.f32 %v499, %v534
    %v548 = vmul.f32 %v500, %v539
    %v549 = vsub.f32 1.0, %v541
    %v550 = vsub.f32 1.0, %v542
    %v551 = vsub.f32 1.0, %v543
    %v552 = vsub.f32 1.0, %v544
    %v553 = vsub.f32 1.0, %v545
    %v554 = vsub.f32 1.0, %v546
    %v555 = vsub.f32 1.0, %v547
    %v556 = vsub.f32 1.0, %v548
    %v557 = vmax.f32 %v549, 1e-06
    %v558 = vmax.f32 %v550, 1e-06
    %v559 = vmax.f32 %v551, 1e-06
    %v560 = vmax.f32 %v552, 1e-06
    %v561 = vmax.f32 %v553, 1e-06
    %v562 = vmax.f32 %v554, 1e-06
    %v563 = vmax.f32 %v555, 1e-06
    %v564 = vmax.f32 %v556, 1e-06
    %v565 = vlog2.pop %v557
    %v566 = vmul.f32 %v565, 0.6931472
    %v567 = vlog2.pop %v558
    %v568 = vmul.f32 %v567, 0.6931472
    %v569 = vlog2.pop %v559
    %v570 = vmul.f32 %v569, 0.6931472
    %v571 = vlog2.pop %v560
    %v572 = vmul.f32 %v571, 0.6931472
    %v573 = vlog2.pop %v561
    %v574 = vmul.f32 %v573, 0.6931472
    %v575 = vlog2.pop %v562
    %v576 = vmul.f32 %v575, 0.6931472
    %v577 = vlog2.pop %v563
    %v578 = vmul.f32 %v577, 0.6931472
    %v579 = vlog2.pop %v564
    %v580 = vmul.f32 %v579, 0.6931472
    %v581 = vadd.f32 %v418, %v566
    %v582 = vadd.f32 %v419, %v568
    %v583 = vadd.f32 %v420, %v570
    %v584 = vadd.f32 %v421, %v572
    %v585 = vadd.f32 %v422, %v574
    %v586 = vadd.f32 %v423, %v576
    %v587 = vadd.f32 %v424, %v578
    %v588 = vadd.f32 %v425, %v580
    %vm589 = vcmask 523264
    %v591 = vsel %vm589, %v50, 0
    %v594 = vsel %vm589, %v51, 0
    %v597 = vsel %vm589, %v52, 0
    %v600 = vsel %vm589, %v53, 0
    %v603 = vsel %vm589, %v54, 0
    %v606 = vsel %vm589, %v55, 0
    %v609 = vsel %vm589, %v56, 0
    %v612 = vsel %vm589, %v57, 0
    %614 = vmatpush.msra.mxu0 0.0
    %615 = vmatpush.msra.mxu0 0.0
    %616 = vmatpush.msra.mxu0 0.0
    %617 = vmatpush.msra.mxu0 0.0
    %618 = vmatpush.msra.mxu0 0.0
    %619 = vmatpush.msra.mxu0 0.0
    %620 = vmatpush.msra.mxu0 0.0
    %621 = vmatpush.msra.mxu0 0.0
    %622 = vmatpush.msra.mxu0 %v588
    %623 = vmatpush.msra.mxu0 %v587
    %624 = vmatpush.msra.mxu0 %v586
    %625 = vmatpush.msra.mxu0 %v585
    %626 = vmatpush.msra.mxu0 %v584
    %627 = vmatpush.msra.mxu0 %v583
    %628 = vmatpush.msra.mxu0 %v582
    %629 = vmatpush.msra.mxu0 %v581
    %630 = vmatmul.f32.gmra.mxu0 %v591
    %v631 = vpop.f32.mrf.mxu0
    %v632 = vadd.f32 0.0, %v631
    %633 = vmatmul.f32.gmra.mxu0 %v594
    %v634 = vpop.f32.mrf.mxu0
    %v635 = vadd.f32 0.0, %v634
    %636 = vmatmul.f32.gmra.mxu0 %v597
    %v637 = vpop.f32.mrf.mxu0
    %v638 = vadd.f32 0.0, %v637
    %639 = vmatmul.f32.gmra.mxu0 %v600
    %v640 = vpop.f32.mrf.mxu0
    %v641 = vadd.f32 0.0, %v640
    %642 = vmatmul.f32.gmra.mxu0 %v603
    %v643 = vpop.f32.mrf.mxu0
    %v644 = vadd.f32 0.0, %v643
    %645 = vmatmul.f32.gmra.mxu0 %v606
    %v646 = vpop.f32.mrf.mxu0
    %v647 = vadd.f32 0.0, %v646
    %648 = vmatmul.f32.gmra.mxu0 %v609
    %v649 = vpop.f32.mrf.mxu0
    %v650 = vadd.f32 0.0, %v649
    %651 = vmatmul.f32.gmra.mxu0 %v612
    %v652 = vpop.f32.mrf.mxu0
    %v653 = vadd.f32 0.0, %v652
    %654 = vdwg.mxu0
    %v655 = vsub.f32 %v632, %v566
    %v656 = vsub.f32 %v635, %v568
    %v657 = vsub.f32 %v638, %v570
    %v658 = vsub.f32 %v641, %v572
    %v659 = vsub.f32 %v644, %v574
    %v660 = vsub.f32 %v647, %v576
    %v661 = vsub.f32 %v650, %v578
    %v662 = vsub.f32 %v653, %v580
    %v663 = vmul.f32 %v655, 1.442695
    %v664 = vpow.pop %v663
    %v665 = vmul.f32 %v656, 1.442695
    %v666 = vpow.pop %v665
    %v667 = vmul.f32 %v657, 1.442695
    %v668 = vpow.pop %v667
    %v669 = vmul.f32 %v658, 1.442695
    %v670 = vpow.pop %v669
    %v671 = vmul.f32 %v659, 1.442695
    %v672 = vpow.pop %v671
    %v673 = vmul.f32 %v660, 1.442695
    %v674 = vpow.pop %v673
    %v675 = vmul.f32 %v661, 1.442695
    %v676 = vpow.pop %v675
    %v677 = vmul.f32 %v662, 1.442695
    %v678 = vpow.pop %v677
    %v679 = vadd.f32 %v541, %v426
    %v680 = vadd.f32 %v542, %v427
    %v681 = vadd.f32 %v543, %v428
    %v682 = vadd.f32 %v544, %v429
    %v683 = vadd.f32 %v545, %v430
    %v684 = vadd.f32 %v546, %v431
    %v685 = vadd.f32 %v547, %v432
    %v686 = vadd.f32 %v548, %v433
    %v687 = vmul.f32 %v664, %v679
    %v688 = vmul.f32 %v666, %v680
    %v689 = vmul.f32 %v668, %v681
    %v690 = vmul.f32 %v670, %v682
    %v691 = vmul.f32 %v672, %v683
    %v692 = vmul.f32 %v674, %v684
    %v693 = vmul.f32 %v676, %v685
    %v694 = vmul.f32 %v678, %v686
    %v695 = vmul.f32 %v687, %v58
    %v696 = vmul.f32 %v688, %v59
    %v697 = vmul.f32 %v689, %v60
    %v698 = vmul.f32 %v690, %v61
    %v699 = vmul.f32 %v691, %v62
    %v700 = vmul.f32 %v692, %v63
    %v701 = vmul.f32 %v693, %v64
    %v702 = vmul.f32 %v694, %v65
    %703 = vst [vmem:[#allocation7] sm:$0xff] %v695
    %704 = vst [vmem:[#allocation7 + $0x8] sm:$0xff] %v696
    %705 = vst [vmem:[#allocation7 + $0x10] sm:$0xff] %v697
    %706 = vst [vmem:[#allocation7 + $0x18] sm:$0xff] %v698
    %707 = vst [vmem:[#allocation7 + $0x20] sm:$0xff] %v699
    %708 = vst [vmem:[#allocation7 + $0x28] sm:$0xff] %v700
    %709 = vst [vmem:[#allocation7 + $0x30] sm:$0xff] %v701
    %710 = vst [vmem:[#allocation7 + $0x38] sm:$0xff] %v702
    %s711 = scalar_lea.vmem [#allocation2], 64
    %v712 = vld [vmem:[%s711] sm:$0xff]
    %v713 = vld [vmem:[%s711 + $0x8] sm:$0xff]
    %v714 = vld [vmem:[%s711 + $0x10] sm:$0xff]
    %v715 = vld [vmem:[%s711 + $0x18] sm:$0xff]
    %v716 = vld [vmem:[%s711 + $0x20] sm:$0xff]
    %v717 = vld [vmem:[%s711 + $0x28] sm:$0xff]
    %v718 = vld [vmem:[%s711 + $0x30] sm:$0xff]
    %v719 = vld [vmem:[%s711 + $0x38] sm:$0xff]
    %vm720 = vcmp.eq.s32.totalorder %v712, 1
    %vm721 = vcmp.eq.s32.totalorder %v713, 1
    %vm722 = vcmp.eq.s32.totalorder %v714, 1
    %vm723 = vcmp.eq.s32.totalorder %v715, 1
    %vm724 = vcmp.eq.s32.totalorder %v716, 1
    %vm725 = vcmp.eq.s32.totalorder %v717, 1
    %vm726 = vcmp.eq.s32.totalorder %v718, 1
    %vm727 = vcmp.eq.s32.totalorder %v719, 1
    %v728 = vsel %vm720, 1.5, 1.0
    %v729 = vsel %vm721, 1.5, 1.0
    %v730 = vsel %vm722, 1.5, 1.0
    %v731 = vsel %vm723, 1.5, 1.0
    %v732 = vsel %vm724, 1.5, 1.0
    %v733 = vsel %vm725, 1.5, 1.0
    %v734 = vsel %vm726, 1.5, 1.0
    %v735 = vsel %vm727, 1.5, 1.0
    %v736 = vsel %vm720, -0.024999999, -0.01
    %v737 = vsel %vm721, -0.024999999, -0.01
    %v738 = vsel %vm722, -0.024999999, -0.01
    %v739 = vsel %vm723, -0.024999999, -0.01
    %v740 = vsel %vm724, -0.024999999, -0.01
    %v741 = vsel %vm725, -0.024999999, -0.01
    %v742 = vsel %vm726, -0.024999999, -0.01
    %v743 = vsel %vm727, -0.024999999, -0.01
    %v744 = vsel %vm720, 0.015000001, 0.0
    %v745 = vsel %vm721, 0.015000001, 0.0
    %v746 = vsel %vm722, 0.015000001, 0.0
    %v747 = vsel %vm723, 0.015000001, 0.0
    %v748 = vsel %vm724, 0.015000001, 0.0
    %v749 = vsel %vm725, 0.015000001, 0.0
    %v750 = vsel %vm726, 0.015000001, 0.0
    %v751 = vsel %vm727, 0.015000001, 0.0
    %vm752 = vcmp.eq.s32.totalorder %v712, 2
    %vm753 = vcmp.eq.s32.totalorder %v713, 2
    %vm754 = vcmp.eq.s32.totalorder %v714, 2
    %vm755 = vcmp.eq.s32.totalorder %v715, 2
    %vm756 = vcmp.eq.s32.totalorder %v716, 2
    %vm757 = vcmp.eq.s32.totalorder %v717, 2
    %vm758 = vcmp.eq.s32.totalorder %v718, 2
    %vm759 = vcmp.eq.s32.totalorder %v719, 2
    %v760 = vsel %vm752, 2.0, %v728
    %v761 = vsel %vm753, 2.0, %v729
    %v762 = vsel %vm754, 2.0, %v730
    %v763 = vsel %vm755, 2.0, %v731
    %v764 = vsel %vm756, 2.0, %v732
    %v765 = vsel %vm757, 2.0, %v733
    %v766 = vsel %vm758, 2.0, %v734
    %v767 = vsel %vm759, 2.0, %v735
    %v768 = vsel %vm752, -0.04, %v736
    %v769 = vsel %vm753, -0.04, %v737
    %v770 = vsel %vm754, -0.04, %v738
    %v771 = vsel %vm755, -0.04, %v739
    %v772 = vsel %vm756, -0.04, %v740
    %v773 = vsel %vm757, -0.04, %v741
    %v774 = vsel %vm758, -0.04, %v742
    %v775 = vsel %vm759, -0.04, %v743
    %v776 = vsel %vm752, 0.030000001, %v744
    %v777 = vsel %vm753, 0.030000001, %v745
    %v778 = vsel %vm754, 0.030000001, %v746
    %v779 = vsel %vm755, 0.030000001, %v747
    %v780 = vsel %vm756, 0.030000001, %v748
    %v781 = vsel %vm757, 0.030000001, %v749
    %v782 = vsel %vm758, 0.030000001, %v750
    %v783 = vsel %vm759, 0.030000001, %v751
    %vm784 = vcmp.eq.s32.totalorder %v712, 3
    %vm785 = vcmp.eq.s32.totalorder %v713, 3
    %vm786 = vcmp.eq.s32.totalorder %v714, 3
    %vm787 = vcmp.eq.s32.totalorder %v715, 3
    %vm788 = vcmp.eq.s32.totalorder %v716, 3
    %vm789 = vcmp.eq.s32.totalorder %v717, 3
    %vm790 = vcmp.eq.s32.totalorder %v718, 3
    %vm791 = vcmp.eq.s32.totalorder %v719, 3
    %v792 = vsel %vm784, 2.5, %v760
    %v793 = vsel %vm785, 2.5, %v761
    %v794 = vsel %vm786, 2.5, %v762
    %v795 = vsel %vm787, 2.5, %v763
    %v796 = vsel %vm788, 2.5, %v764
    %v797 = vsel %vm789, 2.5, %v765
    %v798 = vsel %vm790, 2.5, %v766
    %v799 = vsel %vm791, 2.5, %v767
    %v800 = vsel %vm784, -0.055, %v768
    %v801 = vsel %vm785, -0.055, %v769
    %v802 = vsel %vm786, -0.055, %v770
    %v803 = vsel %vm787, -0.055, %v771
    %v804 = vsel %vm788, -0.055, %v772
    %v805 = vsel %vm789, -0.055, %v773
    %v806 = vsel %vm790, -0.055, %v774
    %v807 = vsel %vm791, -0.055, %v775
    %v808 = vsel %vm784, 0.045, %v776
    %v809 = vsel %vm785, 0.045, %v777
    %v810 = vsel %vm786, 0.045, %v778
    %v811 = vsel %vm787, 0.045, %v779
    %v812 = vsel %vm788, 0.045, %v780
    %v813 = vsel %vm789, 0.045, %v781
    %v814 = vsel %vm790, 0.045, %v782
    %v815 = vsel %vm791, 0.045, %v783
    %vm816 = vcmp.eq.s32.totalorder %v712, 4
    %vm817 = vcmp.eq.s32.totalorder %v713, 4
    %vm818 = vcmp.eq.s32.totalorder %v714, 4
    %vm819 = vcmp.eq.s32.totalorder %v715, 4
    %vm820 = vcmp.eq.s32.totalorder %v716, 4
    %vm821 = vcmp.eq.s32.totalorder %v717, 4
    %vm822 = vcmp.eq.s32.totalorder %v718, 4
    %vm823 = vcmp.eq.s32.totalorder %v719, 4
    %v824 = vsel %vm816, 3.0, %v792
    %v825 = vsel %vm817, 3.0, %v793
    %v826 = vsel %vm818, 3.0, %v794
    %v827 = vsel %vm819, 3.0, %v795
    %v828 = vsel %vm820, 3.0, %v796
    %v829 = vsel %vm821, 3.0, %v797
    %v830 = vsel %vm822, 3.0, %v798
    %v831 = vsel %vm823, 3.0, %v799
    %v832 = vsel %vm816, -0.07, %v800
    %v833 = vsel %vm817, -0.07, %v801
    %v834 = vsel %vm818, -0.07, %v802
    %v835 = vsel %vm819, -0.07, %v803
    %v836 = vsel %vm820, -0.07, %v804
    %v837 = vsel %vm821, -0.07, %v805
    %v838 = vsel %vm822, -0.07, %v806
    %v839 = vsel %vm823, -0.07, %v807
    %v840 = vsel %vm816, 0.060000002, %v808
    %v841 = vsel %vm817, 0.060000002, %v809
    %v842 = vsel %vm818, 0.060000002, %v810
    %v843 = vsel %vm819, 0.060000002, %v811
    %v844 = vsel %vm820, 0.060000002, %v812
    %v845 = vsel %vm821, 0.060000002, %v813
    %v846 = vsel %vm822, 0.060000002, %v814
    %v847 = vsel %vm823, 0.060000002, %v815
    %vm848 = vcmp.eq.s32.totalorder %v712, 5
    %vm849 = vcmp.eq.s32.totalorder %v713, 5
    %vm850 = vcmp.eq.s32.totalorder %v714, 5
    %vm851 = vcmp.eq.s32.totalorder %v715, 5
    %vm852 = vcmp.eq.s32.totalorder %v716, 5
    %vm853 = vcmp.eq.s32.totalorder %v717, 5
    %vm854 = vcmp.eq.s32.totalorder %v718, 5
    %vm855 = vcmp.eq.s32.totalorder %v719, 5
    %v856 = vsel %vm848, 3.5, %v824
    %v857 = vsel %vm849, 3.5, %v825
    %v858 = vsel %vm850, 3.5, %v826
    %v859 = vsel %vm851, 3.5, %v827
    %v860 = vsel %vm852, 3.5, %v828
    %v861 = vsel %vm853, 3.5, %v829
    %v862 = vsel %vm854, 3.5, %v830
    %v863 = vsel %vm855, 3.5, %v831
    %v864 = vsel %vm848, -0.08499999, %v832
    %v865 = vsel %vm849, -0.08499999, %v833
    %v866 = vsel %vm850, -0.08499999, %v834
    %v867 = vsel %vm851, -0.08499999, %v835
    %v868 = vsel %vm852, -0.08499999, %v836
    %v869 = vsel %vm853, -0.08499999, %v837
    %v870 = vsel %vm854, -0.08499999, %v838
    %v871 = vsel %vm855, -0.08499999, %v839
    %v872 = vsel %vm848, 0.075, %v840
    %v873 = vsel %vm849, 0.075, %v841
    %v874 = vsel %vm850, 0.075, %v842
    %v875 = vsel %vm851, 0.075, %v843
    %v876 = vsel %vm852, 0.075, %v844
    %v877 = vsel %vm853, 0.075, %v845
    %v878 = vsel %vm854, 0.075, %v846
    %v879 = vsel %vm855, 0.075, %v847
    %vm880 = vcmp.eq.s32.totalorder %v712, 6
    %vm881 = vcmp.eq.s32.totalorder %v713, 6
    %vm882 = vcmp.eq.s32.totalorder %v714, 6
    %vm883 = vcmp.eq.s32.totalorder %v715, 6
    %vm884 = vcmp.eq.s32.totalorder %v716, 6
    %vm885 = vcmp.eq.s32.totalorder %v717, 6
    %vm886 = vcmp.eq.s32.totalorder %v718, 6
    %vm887 = vcmp.eq.s32.totalorder %v719, 6
    %v888 = vsel %vm880, 4.0, %v856
    %v889 = vsel %vm881, 4.0, %v857
    %v890 = vsel %vm882, 4.0, %v858
    %v891 = vsel %vm883, 4.0, %v859
    %v892 = vsel %vm884, 4.0, %v860
    %v893 = vsel %vm885, 4.0, %v861
    %v894 = vsel %vm886, 4.0, %v862
    %v895 = vsel %vm887, 4.0, %v863
    %v896 = vsel %vm880, -0.099999994, %v864
    %v897 = vsel %vm881, -0.099999994, %v865
    %v898 = vsel %vm882, -0.099999994, %v866
    %v899 = vsel %vm883, -0.099999994, %v867
    %v900 = vsel %vm884, -0.099999994, %v868
    %v901 = vsel %vm885, -0.099999994, %v869
    %v902 = vsel %vm886, -0.099999994, %v870
    %v903 = vsel %vm887, -0.099999994, %v871
    %v904 = vsel %vm880, 0.09, %v872
    %v905 = vsel %vm881, 0.09, %v873
    %v906 = vsel %vm882, 0.09, %v874
    %v907 = vsel %vm883, 0.09, %v875
    %v908 = vsel %vm884, 0.09, %v876
    %v909 = vsel %vm885, 0.09, %v877
    %v910 = vsel %vm886, 0.09, %v878
    %v911 = vsel %vm887, 0.09, %v879
    %vm912 = vcmp.eq.s32.totalorder %v712, 7
    %vm913 = vcmp.eq.s32.totalorder %v713, 7
    %vm914 = vcmp.eq.s32.totalorder %v714, 7
    %vm915 = vcmp.eq.s32.totalorder %v715, 7
    %vm916 = vcmp.eq.s32.totalorder %v716, 7
    %vm917 = vcmp.eq.s32.totalorder %v717, 7
    %vm918 = vcmp.eq.s32.totalorder %v718, 7
    %vm919 = vcmp.eq.s32.totalorder %v719, 7
    %v920 = vsel %vm912, 4.5, %v888
    %v921 = vsel %vm913, 4.5, %v889
    %v922 = vsel %vm914, 4.5, %v890
    %v923 = vsel %vm915, 4.5, %v891
    %v924 = vsel %vm916, 4.5, %v892
    %v925 = vsel %vm917, 4.5, %v893
    %v926 = vsel %vm918, 4.5, %v894
    %v927 = vsel %vm919, 4.5, %v895
    %v928 = vsel %vm912, -0.114999995, %v896
    %v929 = vsel %vm913, -0.114999995, %v897
    %v930 = vsel %vm914, -0.114999995, %v898
    %v931 = vsel %vm915, -0.114999995, %v899
    %v932 = vsel %vm916, -0.114999995, %v900
    %v933 = vsel %vm917, -0.114999995, %v901
    %v934 = vsel %vm918, -0.114999995, %v902
    %v935 = vsel %vm919, -0.114999995, %v903
    %v936 = vsel %vm912, 0.105000004, %v904
    %v937 = vsel %vm913, 0.105000004, %v905
    %v938 = vsel %vm914, 0.105000004, %v906
    %v939 = vsel %vm915, 0.105000004, %v907
    %v940 = vsel %vm916, 0.105000004, %v908
    %v941 = vsel %vm917, 0.105000004, %v909
    %v942 = vsel %vm918, 0.105000004, %v910
    %v943 = vsel %vm919, 0.105000004, %v911
    %vm944 = vcmp.eq.s32.totalorder %v712, 8
    %vm945 = vcmp.eq.s32.totalorder %v713, 8
    %vm946 = vcmp.eq.s32.totalorder %v714, 8
    %vm947 = vcmp.eq.s32.totalorder %v715, 8
    %vm948 = vcmp.eq.s32.totalorder %v716, 8
    %vm949 = vcmp.eq.s32.totalorder %v717, 8
    %vm950 = vcmp.eq.s32.totalorder %v718, 8
    %vm951 = vcmp.eq.s32.totalorder %v719, 8
    %v952 = vsel %vm944, 5.0, %v920
    %v953 = vsel %vm945, 5.0, %v921
    %v954 = vsel %vm946, 5.0, %v922
    %v955 = vsel %vm947, 5.0, %v923
    %v956 = vsel %vm948, 5.0, %v924
    %v957 = vsel %vm949, 5.0, %v925
    %v958 = vsel %vm950, 5.0, %v926
    %v959 = vsel %vm951, 5.0, %v927
    %v960 = vsel %vm944, -0.13, %v928
    %v961 = vsel %vm945, -0.13, %v929
    %v962 = vsel %vm946, -0.13, %v930
    %v963 = vsel %vm947, -0.13, %v931
    %v964 = vsel %vm948, -0.13, %v932
    %v965 = vsel %vm949, -0.13, %v933
    %v966 = vsel %vm950, -0.13, %v934
    %v967 = vsel %vm951, -0.13, %v935
    %v968 = vsel %vm944, 0.120000005, %v936
    %v969 = vsel %vm945, 0.120000005, %v937
    %v970 = vsel %vm946, 0.120000005, %v938
    %v971 = vsel %vm947, 0.120000005, %v939
    %v972 = vsel %vm948, 0.120000005, %v940
    %v973 = vsel %vm949, 0.120000005, %v941
    %v974 = vsel %vm950, 0.120000005, %v942
    %v975 = vsel %vm951, 0.120000005, %v943
    %vm976 = vcmp.eq.s32.totalorder %v712, 9
    %vm977 = vcmp.eq.s32.totalorder %v713, 9
    %vm978 = vcmp.eq.s32.totalorder %v714, 9
    %vm979 = vcmp.eq.s32.totalorder %v715, 9
    %vm980 = vcmp.eq.s32.totalorder %v716, 9
    %vm981 = vcmp.eq.s32.totalorder %v717, 9
    %vm982 = vcmp.eq.s32.totalorder %v718, 9
    %vm983 = vcmp.eq.s32.totalorder %v719, 9
    %v984 = vsel %vm976, 5.5, %v952
    %v985 = vsel %vm977, 5.5, %v953
    %v986 = vsel %vm978, 5.5, %v954
    %v987 = vsel %vm979, 5.5, %v955
    %v988 = vsel %vm980, 5.5, %v956
    %v989 = vsel %vm981, 5.5, %v957
    %v990 = vsel %vm982, 5.5, %v958
    %v991 = vsel %vm983, 5.5, %v959
    %v992 = vsel %vm976, -0.145, %v960
    %v993 = vsel %vm977, -0.145, %v961
    %v994 = vsel %vm978, -0.145, %v962
    %v995 = vsel %vm979, -0.145, %v963
    %v996 = vsel %vm980, -0.145, %v964
    %v997 = vsel %vm981, -0.145, %v965
    %v998 = vsel %vm982, -0.145, %v966
    %v999 = vsel %vm983, -0.145, %v967
    %v1000 = vsel %vm976, 0.135, %v968
    %v1001 = vsel %vm977, 0.135, %v969
    %v1002 = vsel %vm978, 0.135, %v970
    %v1003 = vsel %vm979, 0.135, %v971
    %v1004 = vsel %vm980, 0.135, %v972
    %v1005 = vsel %vm981, 0.135, %v973
    %v1006 = vsel %vm982, 0.135, %v974
    %v1007 = vsel %vm983, 0.135, %v975
    %vm1008 = vcmp.eq.s32.totalorder %v712, 10
    %vm1009 = vcmp.eq.s32.totalorder %v713, 10
    %vm1010 = vcmp.eq.s32.totalorder %v714, 10
    %vm1011 = vcmp.eq.s32.totalorder %v715, 10
    %vm1012 = vcmp.eq.s32.totalorder %v716, 10
    %vm1013 = vcmp.eq.s32.totalorder %v717, 10
    %vm1014 = vcmp.eq.s32.totalorder %v718, 10
    %vm1015 = vcmp.eq.s32.totalorder %v719, 10
    %v1016 = vsel %vm1008, 6.0, %v984
    %v1017 = vsel %vm1009, 6.0, %v985
    %v1018 = vsel %vm1010, 6.0, %v986
    %v1019 = vsel %vm1011, 6.0, %v987
    %v1020 = vsel %vm1012, 6.0, %v988
    %v1021 = vsel %vm1013, 6.0, %v989
    %v1022 = vsel %vm1014, 6.0, %v990
    %v1023 = vsel %vm1015, 6.0, %v991
    %v1024 = vsel %vm1008, -0.16, %v992
    %v1025 = vsel %vm1009, -0.16, %v993
    %v1026 = vsel %vm1010, -0.16, %v994
    %v1027 = vsel %vm1011, -0.16, %v995
    %v1028 = vsel %vm1012, -0.16, %v996
    %v1029 = vsel %vm1013, -0.16, %v997
    %v1030 = vsel %vm1014, -0.16, %v998
    %v1031 = vsel %vm1015, -0.16, %v999
    %v1032 = vsel %vm1008, 0.15, %v1000
    %v1033 = vsel %vm1009, 0.15, %v1001
    %v1034 = vsel %vm1010, 0.15, %v1002
    %v1035 = vsel %vm1011, 0.15, %v1003
    %v1036 = vsel %vm1012, 0.15, %v1004
    %v1037 = vsel %vm1013, 0.15, %v1005
    %v1038 = vsel %vm1014, 0.15, %v1006
    %v1039 = vsel %vm1015, 0.15, %v1007
    %vm1040 = vcmp.eq.s32.totalorder %v712, 11
    %vm1041 = vcmp.eq.s32.totalorder %v713, 11
    %vm1042 = vcmp.eq.s32.totalorder %v714, 11
    %vm1043 = vcmp.eq.s32.totalorder %v715, 11
    %vm1044 = vcmp.eq.s32.totalorder %v716, 11
    %vm1045 = vcmp.eq.s32.totalorder %v717, 11
    %vm1046 = vcmp.eq.s32.totalorder %v718, 11
    %vm1047 = vcmp.eq.s32.totalorder %v719, 11
    %v1048 = vsel %vm1040, 6.5, %v1016
    %v1049 = vsel %vm1041, 6.5, %v1017
    %v1050 = vsel %vm1042, 6.5, %v1018
    %v1051 = vsel %vm1043, 6.5, %v1019
    %v1052 = vsel %vm1044, 6.5, %v1020
    %v1053 = vsel %vm1045, 6.5, %v1021
    %v1054 = vsel %vm1046, 6.5, %v1022
    %v1055 = vsel %vm1047, 6.5, %v1023
    %v1056 = vsel %vm1040, -0.175, %v1024
    %v1057 = vsel %vm1041, -0.175, %v1025
    %v1058 = vsel %vm1042, -0.175, %v1026
    %v1059 = vsel %vm1043, -0.175, %v1027
    %v1060 = vsel %vm1044, -0.175, %v1028
    %v1061 = vsel %vm1045, -0.175, %v1029
    %v1062 = vsel %vm1046, -0.175, %v1030
    %v1063 = vsel %vm1047, -0.175, %v1031
    %v1064 = vsel %vm1040, 0.165, %v1032
    %v1065 = vsel %vm1041, 0.165, %v1033
    %v1066 = vsel %vm1042, 0.165, %v1034
    %v1067 = vsel %vm1043, 0.165, %v1035
    %v1068 = vsel %vm1044, 0.165, %v1036
    %v1069 = vsel %vm1045, 0.165, %v1037
    %v1070 = vsel %vm1046, 0.165, %v1038
    %v1071 = vsel %vm1047, 0.165, %v1039
    %v1072 = vrot.slane %v1048, 1
    %v1073 = vrot.slane %v1049, 1
    %v1074 = vrot.slane %v1050, 1
    %v1075 = vrot.slane %v1051, 1
    %v1076 = vrot.slane %v1052, 1
    %v1077 = vrot.slane %v1053, 1
    %v1078 = vrot.slane %v1054, 1
    %v1079 = vrot.slane %v1055, 1
    %v1080 = vsel %vm444, %v1078, %v1079
    %v1081 = vsel %vm444, %v1077, %v1078
    %v1082 = vsel %vm444, %v1076, %v1077
    %v1083 = vsel %vm444, %v1075, %v1076
    %v1084 = vsel %vm444, %v1074, %v1075
    %v1085 = vsel %vm444, %v1073, %v1074
    %v1086 = vsel %vm444, %v1072, %v1073
    %v1087 = vsel %vm444, %v1079, %v1072
    %v1088 = vsub.f32 %v1086, %v1048
    %v1089 = vsub.f32 %v1085, %v1049
    %v1090 = vsub.f32 %v1084, %v1050
    %v1091 = vsub.f32 %v1083, %v1051
    %v1092 = vsub.f32 %v1082, %v1052
    %v1093 = vsub.f32 %v1081, %v1053
    %v1094 = vsub.f32 %v1080, %v1054
    %v1095 = vsub.f32 %v1087, %v1055
    %v1096 = vadd.f32 %v1086, %v1048
    %v1097 = vadd.f32 %v1085, %v1049
    %v1098 = vadd.f32 %v1084, %v1050
    %v1099 = vadd.f32 %v1083, %v1051
    %v1100 = vadd.f32 %v1082, %v1052
    %v1101 = vadd.f32 %v1081, %v1053
    %v1102 = vadd.f32 %v1080, %v1054
    %v1103 = vadd.f32 %v1087, %v1055
    %v1104 = vadd.f32 %v1096, 1e-06
    %v1105 = vadd.f32 %v1097, 1e-06
    %v1106 = vadd.f32 %v1098, 1e-06
    %v1107 = vadd.f32 %v1099, 1e-06
    %v1108 = vadd.f32 %v1100, 1e-06
    %v1109 = vadd.f32 %v1101, 1e-06
    %v1110 = vadd.f32 %v1102, 1e-06
    %v1111 = vadd.f32 %v1103, 1e-06
    %v1112 = vrcp.pop %v1104
    %v1113 = vrcp.pop %v1105
    %v1114 = vrcp.pop %v1106
    %v1115 = vrcp.pop %v1107
    %v1116 = vrcp.pop %v1108
    %v1117 = vrcp.pop %v1109
    %v1118 = vrcp.pop %v1110
    %v1119 = vrcp.pop %v1111
    %v1120 = vmul.f32 %v1088, %v1112
    %v1121 = vmul.f32 %v1089, %v1113
    %v1122 = vmul.f32 %v1090, %v1114
    %v1123 = vmul.f32 %v1091, %v1115
    %v1124 = vmul.f32 %v1092, %v1116
    %v1125 = vmul.f32 %v1093, %v1117
    %v1126 = vmul.f32 %v1094, %v1118
    %v1127 = vmul.f32 %v1095, %v1119
    %v1128 = vmul.f32 %v1120, %v1120
    %v1129 = vmul.f32 %v1121, %v1121
    %v1130 = vmul.f32 %v1122, %v1122
    %v1131 = vmul.f32 %v1123, %v1123
    %v1132 = vmul.f32 %v1124, %v1124
    %v1133 = vmul.f32 %v1125, %v1125
    %v1134 = vmul.f32 %v1126, %v1126
    %v1135 = vmul.f32 %v1127, %v1127
    %v1136 = vmul.f32 %v1128, %v504
    %v1137 = vmul.f32 %v1129, %v509
    %v1138 = vmul.f32 %v1130, %v514
    %v1139 = vmul.f32 %v1131, %v519
    %v1140 = vmul.f32 %v1132, %v524
    %v1141 = vmul.f32 %v1133, %v529
    %v1142 = vmul.f32 %v1134, %v534
    %v1143 = vmul.f32 %v1135, %v539
    %v1144 = vsub.f32 1.0, %v1136
    %v1145 = vsub.f32 1.0, %v1137
    %v1146 = vsub.f32 1.0, %v1138
    %v1147 = vsub.f32 1.0, %v1139
    %v1148 = vsub.f32 1.0, %v1140
    %v1149 = vsub.f32 1.0, %v1141
    %v1150 = vsub.f32 1.0, %v1142
    %v1151 = vsub.f32 1.0, %v1143
    %v1152 = vmax.f32 %v1144, 1e-06
    %v1153 = vmax.f32 %v1145, 1e-06
    %v1154 = vmax.f32 %v1146, 1e-06
    %v1155 = vmax.f32 %v1147, 1e-06
    %v1156 = vmax.f32 %v1148, 1e-06
    %v1157 = vmax.f32 %v1149, 1e-06
    %v1158 = vmax.f32 %v1150, 1e-06
    %v1159 = vmax.f32 %v1151, 1e-06
    %v1160 = vlog2.pop %v1152
    %v1161 = vmul.f32 %v1160, 0.6931472
    %v1162 = vlog2.pop %v1153
    %v1163 = vmul.f32 %v1162, 0.6931472
    %v1164 = vlog2.pop %v1154
    %v1165 = vmul.f32 %v1164, 0.6931472
    %v1166 = vlog2.pop %v1155
    %v1167 = vmul.f32 %v1166, 0.6931472
    %v1168 = vlog2.pop %v1156
    %v1169 = vmul.f32 %v1168, 0.6931472
    %v1170 = vlog2.pop %v1157
    %v1171 = vmul.f32 %v1170, 0.6931472
    %v1172 = vlog2.pop %v1158
    %v1173 = vmul.f32 %v1172, 0.6931472
    %v1174 = vlog2.pop %v1159
    %v1175 = vmul.f32 %v1174, 0.6931472
    %v1176 = vadd.f32 %v1056, %v1161
    %v1177 = vadd.f32 %v1057, %v1163
    %v1178 = vadd.f32 %v1058, %v1165
    %v1179 = vadd.f32 %v1059, %v1167
    %v1180 = vadd.f32 %v1060, %v1169
    %v1181 = vadd.f32 %v1061, %v1171
    %v1182 = vadd.f32 %v1062, %v1173
    %v1183 = vadd.f32 %v1063, %v1175
    %1184 = vmatpush.msra.mxu0 0.0
    %1185 = vmatpush.msra.mxu0 0.0
    %1186 = vmatpush.msra.mxu0 0.0
    %1187 = vmatpush.msra.mxu0 0.0
    %1188 = vmatpush.msra.mxu0 0.0
    %1189 = vmatpush.msra.mxu0 0.0
    %1190 = vmatpush.msra.mxu0 0.0
    %1191 = vmatpush.msra.mxu0 0.0
    %1192 = vmatpush.msra.mxu0 %v1183
    %1193 = vmatpush.msra.mxu0 %v1182
    %1194 = vmatpush.msra.mxu0 %v1181
    %1195 = vmatpush.msra.mxu0 %v1180
    %1196 = vmatpush.msra.mxu0 %v1179
    %1197 = vmatpush.msra.mxu0 %v1178
    %1198 = vmatpush.msra.mxu0 %v1177
    %1199 = vmatpush.msra.mxu0 %v1176
    %1200 = vmatmul.f32.gmra.mxu0 %v591
    %v1201 = vpop.f32.mrf.mxu0
    %v1202 = vadd.f32 0.0, %v1201
    %1203 = vmatmul.f32.gmra.mxu0 %v594
    %v1204 = vpop.f32.mrf.mxu0
    %v1205 = vadd.f32 0.0, %v1204
    %1206 = vmatmul.f32.gmra.mxu0 %v597
    %v1207 = vpop.f32.mrf.mxu0
    %v1208 = vadd.f32 0.0, %v1207
    %1209 = vmatmul.f32.gmra.mxu0 %v600
    %v1210 = vpop.f32.mrf.mxu0
    %v1211 = vadd.f32 0.0, %v1210
    %1212 = vmatmul.f32.gmra.mxu0 %v603
    %v1213 = vpop.f32.mrf.mxu0
    %v1214 = vadd.f32 0.0, %v1213
    %1215 = vmatmul.f32.gmra.mxu0 %v606
    %v1216 = vpop.f32.mrf.mxu0
    %v1217 = vadd.f32 0.0, %v1216
    %1218 = vmatmul.f32.gmra.mxu0 %v609
    %v1219 = vpop.f32.mrf.mxu0
    %v1220 = vadd.f32 0.0, %v1219
    %1221 = vmatmul.f32.gmra.mxu0 %v612
    %v1222 = vpop.f32.mrf.mxu0
    %v1223 = vadd.f32 0.0, %v1222
    %1224 = vdwg.mxu0
    %v1225 = vsub.f32 %v1202, %v1161
    %v1226 = vsub.f32 %v1205, %v1163
    %v1227 = vsub.f32 %v1208, %v1165
    %v1228 = vsub.f32 %v1211, %v1167
    %v1229 = vsub.f32 %v1214, %v1169
    %v1230 = vsub.f32 %v1217, %v1171
    %v1231 = vsub.f32 %v1220, %v1173
    %v1232 = vsub.f32 %v1223, %v1175
    %v1233 = vmul.f32 %v1225, 1.442695
    %v1234 = vpow.pop %v1233
    %v1235 = vmul.f32 %v1226, 1.442695
    %v1236 = vpow.pop %v1235
    %v1237 = vmul.f32 %v1227, 1.442695
    %v1238 = vpow.pop %v1237
    %v1239 = vmul.f32 %v1228, 1.442695
    %v1240 = vpow.pop %v1239
    %v1241 = vmul.f32 %v1229, 1.442695
    %v1242 = vpow.pop %v1241
    %v1243 = vmul.f32 %v1230, 1.442695
    %v1244 = vpow.pop %v1243
    %v1245 = vmul.f32 %v1231, 1.442695
    %v1246 = vpow.pop %v1245
    %v1247 = vmul.f32 %v1232, 1.442695
    %v1248 = vpow.pop %v1247
    %v1249 = vadd.f32 %v1136, %v1064
    %v1250 = vadd.f32 %v1137, %v1065
    %v1251 = vadd.f32 %v1138, %v1066
    %v1252 = vadd.f32 %v1139, %v1067
    %v1253 = vadd.f32 %v1140, %v1068
    %v1254 = vadd.f32 %v1141, %v1069
    %v1255 = vadd.f32 %v1142, %v1070
    %v1256 = vadd.f32 %v1143, %v1071
    %v1257 = vmul.f32 %v1234, %v1249
    %v1258 = vmul.f32 %v1236, %v1250
    %v1259 = vmul.f32 %v1238, %v1251
    %v1260 = vmul.f32 %v1240, %v1252
    %v1261 = vmul.f32 %v1242, %v1253
    %v1262 = vmul.f32 %v1244, %v1254
    %v1263 = vmul.f32 %v1246, %v1255
    %v1264 = vmul.f32 %v1248, %v1256
    %v1265 = vmul.f32 %v1257, %v58
    %v1266 = vmul.f32 %v1258, %v59
    %v1267 = vmul.f32 %v1259, %v60
    %v1268 = vmul.f32 %v1260, %v61
    %v1269 = vmul.f32 %v1261, %v62
    %v1270 = vmul.f32 %v1262, %v63
    %v1271 = vmul.f32 %v1263, %v64
    %v1272 = vmul.f32 %v1264, %v65
    %s1273 = scalar_lea.vmem [#allocation7], 64
    %1274 = vst [vmem:[%s1273] sm:$0xff] %v1265
    %1275 = vst [vmem:[%s1273 + $0x8] sm:$0xff] %v1266
    %1276 = vst [vmem:[%s1273 + $0x10] sm:$0xff] %v1267
    %1277 = vst [vmem:[%s1273 + $0x18] sm:$0xff] %v1268
    %1278 = vst [vmem:[%s1273 + $0x20] sm:$0xff] %v1269
    %1279 = vst [vmem:[%s1273 + $0x28] sm:$0xff] %v1270
    %1280 = vst [vmem:[%s1273 + $0x30] sm:$0xff] %v1271
    %1281 = vst [vmem:[%s1273 + $0x38] sm:$0xff] %v1272
    // Predicated region
    $region26: #{tpu_custom_call.1} parent=1 // pred_check
      _
    $region27: #{tpu_custom_call.1} parent=1 // pred_check_branch
      %1283 = sbr.rel (0) target = $region29
    $region28: #{tpu_custom_call.1} parent=1 // pred_region
      %1285 = vsyncadd [#allocation4], 0
      %s1286 = sshll.u32 [#allocation7], 4
      %s1287 = int_to_ptr.vmem [resolvable:$true] %s1286
      %s1288 = sshll.u32 %s4, 4
      %s1289 = int_to_ptr.hbm [resolvable:$true] %s1288
      %1294 = dma.vmem_to_hbm [thread:$0]  %s1287, 2048, %s1289, [#allocation4], 128, 128, 8
    $region29: #{tpu_custom_call.1} parent=1 // pred_fallthru
      _
    // Predicated region
    $region30: #{tpu_custom_call.1} parent=1 // pred_check
      _
    $region31: #{tpu_custom_call.1} parent=1 // pred_check_branch
      %1296 = sbr.rel (0) target = $region33
    $region32: #{tpu_custom_call.1} parent=1 // pred_region
      %1298 = dma.done [#allocation4], 2048
    $region33: #{tpu_custom_call.1} parent=1 // pred_fallthru
      _
    %1299 = vsyncpa [#allocation3], 1
    %1300 = vsyncpa [#allocation6], 1
    %1301 = vsyncpa [#allocation4], 1

</llo_original>
